<compile_context>
chip_gen: v5e
topology: v5e:2x2
jax: 0.10.0
libtpu: 0.0.40
codegen_flags: <defaults>
</compile_context>

<pallas_src>
import math

import jax
import jax.numpy as jnp
import numpy as np
from jax import lax
from jax.experimental import pallas as pl
from jax.experimental.pallas import tpu as pltpu


def _make_offsets_kernel(precision):
    def kernel(x_ref, g_ref, o_ref):
        """x_ref: (TB, W) positions tile; g_ref: (W, W) 0/1 gather matrix."""
        x = x_ref[...]
        # parent gather: par[b, q] = x[b, src(q)] (one nonzero 1.0 per column -> exact)
        par = jnp.dot(
            x,
            g_ref[...],
            preferred_element_type=jnp.float32,
            precision=precision,
        )
        o_ref[...] = (x.astype(jnp.float32) - par).astype(o_ref.dtype)

    return kernel


def _build_gather_matrix(parents, n_joints, n_chan, k, dtype, preserve_root):
    """Constant (k*J*C, k*J*C) block-diagonal one-hot gather matrix (numpy ->
    constant-folded).  gmat[r, q] = 1 iff r is the parent source lane of q
    within the same packed batch block; root columns zeroed when preserve_root.
    Negative parent indices wrap like PyTorch/NumPy indexing."""
    parents = np.asarray(parents).astype(np.int64) % n_joints
    jc = n_joints * n_chan
    src = (parents[:, None] * n_chan + np.arange(n_chan)[None, :]).reshape(jc)
    g = np.zeros((jc, jc), dtype=np.float32)
    g[src, np.arange(jc)] = 1.0
    if preserve_root:
        g[:, :n_chan] = 0.0                      # par(root) = 0 -> offsets_root = pos_root
    if k > 1:
        g = np.kron(np.eye(k, dtype=np.float32), g)
    return jnp.asarray(g, dtype=dtype)


def _plan_tiles(rows, row_bytes, gmat_bytes):
    """Pick batch-tile rows from the real (lane-padded-free) pipelined VMEM
    footprint: 2x input blocks + 2x output blocks + gather matrix."""
    try:
        cap = int(getattr(pltpu.get_tpu_info(), "vmem_capacity_bytes", 64 << 20))
    except Exception:
        cap = 64 << 20                            # conservative: v7x per-core VMEM
    vmem_limit = min(int(cap * 3 // 4), 96 << 20)  # 48 MiB on v7x, 96 MiB on v5e/v6e
    vmem_limit = max(vmem_limit, 32 << 20)

    budget = vmem_limit - 2 * gmat_bytes - (4 << 20)   # headroom for compiler scratch
    per_block = max(min(budget // 4, 8 << 20), 1 << 20)
    tb = max((per_block // row_bytes) // 8 * 8, 8)

    if rows >= 16:
        # Keep >= 2 grid steps so the "parallel" axis can feed both v7x TCs.
        half = (((rows + 1) // 2) + 7) // 8 * 8
        tb = min(tb, half)
    if tb >= rows:
        tb = rows                                  # single full block (always legal)
    return tb, pl.cdiv(rows, tb), vmem_limit


def landmarks_offsets(positions, parents, preserve_root=False):
    """positions: [B, J, C] or [B, T, J, C]; parents: static int sequence/array [J]."""
    orig_shape = positions.shape
    if positions.ndim == 4:
        B, T, J, C = positions.shape
        Bf = B * T
    elif positions.ndim == 3:
        B, J, C = positions.shape
        Bf = B
    else:
        raise ValueError("positions must be rank 3 or 4")

    dtype = positions.dtype
    itemsize = jnp.dtype(dtype).itemsize
    JC = J * C

    # Lane-packing factor: smallest k such that (k * JC) % 128 == 0.
    k = 128 // math.gcd(JC, 128)
    # Guard: for very large skeletons the block-diagonal one-hot matrix becomes
    # O((k*J*C)^2); fall back to the unpacked layout (correct, just masked stores).
    # TODO(synk): replace the dense one-hot matmul with a static per-joint
    # slice/roll gather for large J so the lane-packed layout stays affordable.
    if (k * JC) ** 2 * itemsize > (4 << 20):
        k = 1
    W = k * JC

    x2d = positions.reshape(Bf, JC)                # contiguous, free (no transpose)
    rows = -(-Bf // k)
    pad = rows * k - Bf
    if pad:
        x2d = jnp.pad(x2d, ((0, pad), (0, 0)))
    x2d = x2d.reshape(rows, W)                     # lane-dense slab (W % 128 == 0 if k > 1)

    gmat = _build_gather_matrix(parents, J, C, k, dtype, preserve_root)

    row_bytes = max(W * itemsize, 1)
    gmat_bytes = W * W * itemsize
    tb, num_tiles, vmem_limit = _plan_tiles(rows, row_bytes, gmat_bytes)

    # bf16 single-pass matmul is already exact for a 0/1 gather (f32 accum);
    # f32 needs HIGHEST to reconstruct values to ~1 ulp.
    precision = None if dtype == jnp.bfloat16 else lax.Precision.HIGHEST
    kernel = _make_offsets_kernel(precision)

    out2d = pl.pallas_call(
        kernel,
        out_shape=jax.ShapeDtypeStruct((rows, W), dtype),
        grid=(num_tiles,),
        in_specs=[
            pl.BlockSpec((tb, W), lambda i: (i, 0)),   # positions tile (read once)
            pl.BlockSpec((W, W), lambda i: (0, 0)),    # gather matrix (VMEM-resident)
        ],
        out_specs=pl.BlockSpec((tb, W), lambda i: (i, 0)),
        compiler_params=pltpu.CompilerParams(
            dimension_semantics=("parallel",),
            vmem_limit_bytes=int(vmem_limit),
        ),
    )(x2d, gmat)

    out = out2d.reshape(rows * k, JC)
    if pad:
        out = out[:Bf]
    return out.reshape(orig_shape)


def _reference(positions, parents, preserve_root):
    positions = np.asarray(positions)
    parents = np.asarray(parents)
    if positions.ndim == 3:
        offsets = positions - positions[:, parents]
        if preserve_root:
            offsets[:, 0, :] = positions[:, 0, :]
    else:
        offsets = positions - positions[:, :, parents]
        if preserve_root:
            offsets[:, :, 0, :] = positions[:, :, 0, :]
    return offsets


if __name__ == "__main__":
    key = jax.random.PRNGKey(0)
    k1, k2 = jax.random.split(key)

    J, C = 8, 3
    parents = np.array([0, 0, 1, 2, 3, 1, 5, 6], dtype=np.int32)

    # 3-D case: [B, J, 3]
    pos3 = jax.random.normal(k1, (2, J, C), dtype=jnp.float32)
    # 4-D case: [B, T, J, 3]
    pos4 = jax.random.normal(k2, (2, 5, J, C), dtype=jnp.float32)

    ok = True
    for pos in (pos3, pos4):
        for preserve_root in (False, True):
            out = jax.block_until_ready(
                landmarks_offsets(pos, parents, preserve_root=preserve_root))
            ref = _reference(pos, parents, preserve_root)
            if not np.allclose(np.asarray(out), ref, rtol=1e-5, atol=1e-5):
                ok = False

    print("KERNEL_OK" if ok else "KERNEL_MISMATCH")
</pallas_src>

<mosaic_0001>
module attributes {stable_mosaic.version = 11 : i64} {
  func.func @kernel(%arg0: i32, %arg1: memref<1x384xf32, #tpu.memory_space<vmem>>, %arg2: memref<384x384xf32, #tpu.memory_space<vmem>>, %arg3: memref<1x384xf32, #tpu.memory_space<vmem>>) attributes {dimension_semantics = [#tpu.dimension_semantics<parallel>], iteration_bounds = array<i64: 1>, scalar_prefetch = 0 : i64, scratch_operands = 0 : i64, tpu.core_type = #tpu.core_type<tc>, window_params = [{transform_indices = @transform_0, window_bounds = array<i64: 1, 384>}, {pipeline_mode = #tpu.pipeline_mode<synchronous>, transform_indices = @transform_1, window_bounds = array<i64: 384, 384>}, {transform_indices = @transform_2, window_bounds = array<i64: 1, 384>}]} {
    %c0 = arith.constant 0 : index
    %c0_0 = arith.constant 0 : index
    %0 = vector.load %arg1[%c0, %c0_0] : memref<1x384xf32, #tpu.memory_space<vmem>>, vector<1x384xf32>
    %c0_1 = arith.constant 0 : index
    %c0_2 = arith.constant 0 : index
    %1 = vector.load %arg2[%c0_1, %c0_2] : memref<384x384xf32, #tpu.memory_space<vmem>>, vector<384x384xf32>
    %cst = arith.constant dense<0.000000e+00> : vector<1x384xf32>
    %2 = tpu.matmul %0, %1, %cst {dimension_numbers = #tpu.dot_dimension_numbers<[1], [0], [0], [1], [0, 0, 1, 1], [], []>, precision = #tpu.contract_precision<fp32>} : vector<1x384xf32>, vector<384x384xf32>, vector<1x384xf32> -> vector<1x384xf32>
    %3 = arith.subf %0, %2 : vector<1x384xf32>
    %c0_3 = arith.constant 0 : index
    %c0_4 = arith.constant 0 : index
    %4 = vector.load %arg3[%c0_3, %c0_4] : memref<1x384xf32, #tpu.memory_space<vmem>>, vector<1x384xf32>
    tpu.vector_store %arg3[%c0_3, %c0_4], %3 {strides = array<i32>} : memref<1x384xf32, #tpu.memory_space<vmem>>, vector<1x384xf32>,
    return
  }
  func.func @transform_0(%arg0: i32) -> (i32, i32) {
    %c0_i32 = arith.constant 0 : i32
    %c0_i32_0 = arith.constant 0 : i32
    return %arg0, %c0_i32 : i32, i32
  }
  func.func @transform_1(%arg0: i32) -> (i32, i32) {
    %c0_i32 = arith.constant 0 : i32
    %c0_i32_0 = arith.constant 0 : i32
    %c0_i32_1 = arith.constant 0 : i32
    return %c0_i32, %c0_i32_0 : i32, i32
  }
  func.func @transform_2(%arg0: i32) -> (i32, i32) {
    %c0_i32 = arith.constant 0 : i32
    %c0_i32_0 = arith.constant 0 : i32
    return %arg0, %c0_i32 : i32, i32
  }
}

</mosaic_0001>

<llo_original>
// kernel: tpu_custom_call.1
$region0: #{tpu_custom_call.1}
  #allocation0 [shape = 'u32[]', space=smem, size = 0x4, offset = 0x4, fixed_abs, tag = 'smem constant byte address 0x4 - core index']
  #allocation1 [shape = 'u32[72,128]{1,0:T(1,128)}', space=vmem, size = 0x9000, scoped, tag = 'internal scratch']
  %s0 = inlined_call_operand.hbm [shape: f32[1,384], index: 0, kind: input, shape index: {}]
  %s1 = inlined_call_operand.hbm [shape: f32[384,384], index: 1, kind: input, shape index: {}]
  %s2 = inlined_call_operand.hbm [shape: f32[1,384], index: 2, kind: output, shape index: {}]
  %s3 = sld [smem:[#allocation0]]
  $region26: #{tpu_custom_call.1} parent=0
    _
  %s5 = ssub.s32 1, %s3
  %s6 = scalar_select 0, %s5, %s3
  $region1: #{tpu_custom_call.1} parent=0
    #allocation2 [shape = 'u8[1536]{0}', space=vmem, size = 0x800, scoped, tag = 'input window, operand 0, single buffered']
    #allocation3 [shape = 's32[1]{0}', space=sflag, size = 0x4, scoped, tag = 'scoped memory for tpu_custom_call.1']
    #allocation4 [shape = 's32[1]{0}', space=sflag, size = 0x4, scoped, tag = 'scoped memory for tpu_custom_call.1']
    #allocation5 [shape = 'u8[589824]{0}', space=vmem, size = 0x90000, scoped, tag = 'input window, operand 1, single buffered']
    #allocation6 [shape = 's32[1]{0}', space=sflag, size = 0x4, scoped, tag = 'scoped memory for tpu_custom_call.1']
    #allocation7 [shape = 'u8[1536]{0}', space=vmem, size = 0x800, scoped, tag = 'output window, operand 0, single buffered']
    %7 = vsyncpa [#allocation3], 0
    %8 = vsyncpa [#allocation6], 0
    %9 = vsyncpa [#allocation4], 0
    // Predicated region
    $region2: #{tpu_custom_call.1} parent=1 // pred_check
      _
    $region3: #{tpu_custom_call.1} parent=1 // pred_check_branch
      %11 = sbr.rel (0) target = $region5
    $region4: #{tpu_custom_call.1} parent=1 // pred_region
      %13 = vsyncadd [#allocation3], 0
      %s15 = sshll.u32 %s0, 4
      %s16 = int_to_ptr.hbm [resolvable:$true] %s15
      %s17 = sshll.u32 [#allocation2], 4
      %s18 = int_to_ptr.vmem [resolvable:$true] %s17
      %20 = dma.hbm_to_vmem [thread:$0]  %s16, 48, %s18, [#allocation3]
    $region5: #{tpu_custom_call.1} parent=1 // pred_fallthru
      _
    // Predicated region
    $region6: #{tpu_custom_call.1} parent=1 // pred_check
      _
    $region7: #{tpu_custom_call.1} parent=1 // pred_check_branch
      %22 = sbr.rel (0) target = $region9
    $region8: #{tpu_custom_call.1} parent=1 // pred_region
      %24 = vsyncadd [#allocation6], 0
      %s25 = sshll.u32 %s1, 4
      %s26 = int_to_ptr.hbm [resolvable:$true] %s25
      %s27 = sshll.u32 [#allocation5], 4
      %s28 = int_to_ptr.vmem [resolvable:$true] %s27
      %33 = dma.hbm_to_vmem [thread:$0]  %s26, 18432, %s28, [#allocation6], 384, 384, 24
    $region9: #{tpu_custom_call.1} parent=1 // pred_fallthru
      _
    // Predicated region
    $region10: #{tpu_custom_call.1} parent=1 // pred_check
      _
    $region11: #{tpu_custom_call.1} parent=1 // pred_check_branch
      %35 = sbr.rel (0) target = $region13
    $region12: #{tpu_custom_call.1} parent=1 // pred_region
      %37 = dma.done [#allocation3], 48
    $region13: #{tpu_custom_call.1} parent=1 // pred_fallthru
      _
    // Predicated region
    $region14: #{tpu_custom_call.1} parent=1 // pred_check
      _
    $region15: #{tpu_custom_call.1} parent=1 // pred_check_branch
      %39 = sbr.rel (0) target = $region17
    $region16: #{tpu_custom_call.1} parent=1 // pred_region
      %41 = dma.done [#allocation6], 18432
    $region17: #{tpu_custom_call.1} parent=1 // pred_fallthru
      _
    %v42 = vld [vmem:[#allocation2] sm:$0x7]
    %v43 = vld [vmem:[#allocation5] sm:$0xff]
    %v44 = vld [vmem:[#allocation5 + $0x8] sm:$0xff]
    %v45 = vld [vmem:[#allocation5 + $0x10] sm:$0xff]
    %v46 = vld [vmem:[#allocation5 + $0x18] sm:$0xff]
    %v47 = vld [vmem:[#allocation5 + $0x20] sm:$0xff]
    %v48 = vld [vmem:[#allocation5 + $0x28] sm:$0xff]
    %v49 = vld [vmem:[#allocation5 + $0x30] sm:$0xff]
    %v50 = vld [vmem:[#allocation5 + $0x38] sm:$0xff]
    %v51 = vld [vmem:[#allocation5 + $0x40] sm:$0xff]
    %v52 = vld [vmem:[#allocation5 + $0x48] sm:$0xff]
    %v53 = vld [vmem:[#allocation5 + $0x50] sm:$0xff]
    %v54 = vld [vmem:[#allocation5 + $0x58] sm:$0xff]
    %v55 = vld [vmem:[#allocation5 + $0x60] sm:$0xff]
    %v56 = vld [vmem:[#allocation5 + $0x68] sm:$0xff]
    %v57 = vld [vmem:[#allocation5 + $0x70] sm:$0xff]
    %v58 = vld [vmem:[#allocation5 + $0x78] sm:$0xff]
    %v59 = vld [vmem:[#allocation5 + $0x80] sm:$0xff]
    %v60 = vld [vmem:[#allocation5 + $0x88] sm:$0xff]
    %v61 = vld [vmem:[#allocation5 + $0x90] sm:$0xff]
    %v62 = vld [vmem:[#allocation5 + $0x98] sm:$0xff]
    %v63 = vld [vmem:[#allocation5 + $0xa0] sm:$0xff]
    %v64 = vld [vmem:[#allocation5 + $0xa8] sm:$0xff]
    %v65 = vld [vmem:[#allocation5 + $0xb0] sm:$0xff]
    %v66 = vld [vmem:[#allocation5 + $0xb8] sm:$0xff]
    %v67 = vld [vmem:[#allocation5 + $0xc0] sm:$0xff]
    %v68 = vld [vmem:[#allocation5 + $0xc8] sm:$0xff]
    %v69 = vld [vmem:[#allocation5 + $0xd0] sm:$0xff]
    %v70 = vld [vmem:[#allocation5 + $0xd8] sm:$0xff]
    %v71 = vld [vmem:[#allocation5 + $0xe0] sm:$0xff]
    %v72 = vld [vmem:[#allocation5 + $0xe8] sm:$0xff]
    %v73 = vld [vmem:[#allocation5 + $0xf0] sm:$0xff]
    %v74 = vld [vmem:[#allocation5 + $0xf8] sm:$0xff]
    %v75 = vld [vmem:[#allocation5 + $0x100] sm:$0xff]
    %v76 = vld [vmem:[#allocation5 + $0x108] sm:$0xff]
    %v77 = vld [vmem:[#allocation5 + $0x110] sm:$0xff]
    %v78 = vld [vmem:[#allocation5 + $0x118] sm:$0xff]
    %v79 = vld [vmem:[#allocation5 + $0x120] sm:$0xff]
    %v80 = vld [vmem:[#allocation5 + $0x128] sm:$0xff]
    %v81 = vld [vmem:[#allocation5 + $0x130] sm:$0xff]
    %v82 = vld [vmem:[#allocation5 + $0x138] sm:$0xff]
    %v83 = vld [vmem:[#allocation5 + $0x140] sm:$0xff]
    %v84 = vld [vmem:[#allocation5 + $0x148] sm:$0xff]
    %v85 = vld [vmem:[#allocation5 + $0x150] sm:$0xff]
    %v86 = vld [vmem:[#allocation5 + $0x158] sm:$0xff]
    %v87 = vld [vmem:[#allocation5 + $0x160] sm:$0xff]
    %v88 = vld [vmem:[#allocation5 + $0x168] sm:$0xff]
    %v89 = vld [vmem:[#allocation5 + $0x170] sm:$0xff]
    %v90 = vld [vmem:[#allocation5 + $0x178] sm:$0xff]
    %v91 = vld [vmem:[#allocation5 + $0x180] sm:$0xff]
    %v92 = vld [vmem:[#allocation5 + $0x188] sm:$0xff]
    %v93 = vld [vmem:[#allocation5 + $0x190] sm:$0xff]
    %v94 = vld [vmem:[#allocation5 + $0x198] sm:$0xff]
    %v95 = vld [vmem:[#allocation5 + $0x1a0] sm:$0xff]
    %v96 = vld [vmem:[#allocation5 + $0x1a8] sm:$0xff]
    %v97 = vld [vmem:[#allocation5 + $0x1b0] sm:$0xff]
    %v98 = vld [vmem:[#allocation5 + $0x1b8] sm:$0xff]
    %v99 = vld [vmem:[#allocation5 + $0x1c0] sm:$0xff]
    %v100 = vld [vmem:[#allocation5 + $0x1c8] sm:$0xff]
    %v101 = vld [vmem:[#allocation5 + $0x1d0] sm:$0xff]
    %v102 = vld [vmem:[#allocation5 + $0x1d8] sm:$0xff]
    %v103 = vld [vmem:[#allocation5 + $0x1e0] sm:$0xff]
    %v104 = vld [vmem:[#allocation5 + $0x1e8] sm:$0xff]
    %v105 = vld [vmem:[#allocation5 + $0x1f0] sm:$0xff]
    %v106 = vld [vmem:[#allocation5 + $0x1f8] sm:$0xff]
    %v107 = vld [vmem:[#allocation5 + $0x200] sm:$0xff]
    %v108 = vld [vmem:[#allocation5 + $0x208] sm:$0xff]
    %v109 = vld [vmem:[#allocation5 + $0x210] sm:$0xff]
    %v110 = vld [vmem:[#allocation5 + $0x218] sm:$0xff]
    %v111 = vld [vmem:[#allocation5 + $0x220] sm:$0xff]
    %v112 = vld [vmem:[#allocation5 + $0x228] sm:$0xff]
    %v113 = vld [vmem:[#allocation5 + $0x230] sm:$0xff]
    %v114 = vld [vmem:[#allocation5 + $0x238] sm:$0xff]
    %v115 = vld [vmem:[#allocation5 + $0x240] sm:$0xff]
    %v116 = vld [vmem:[#allocation5 + $0x248] sm:$0xff]
    %v117 = vld [vmem:[#allocation5 + $0x250] sm:$0xff]
    %v118 = vld [vmem:[#allocation5 + $0x258] sm:$0xff]
    %v119 = vld [vmem:[#allocation5 + $0x260] sm:$0xff]
    %v120 = vld [vmem:[#allocation5 + $0x268] sm:$0xff]
    %v121 = vld [vmem:[#allocation5 + $0x270] sm:$0xff]
    %v122 = vld [vmem:[#allocation5 + $0x278] sm:$0xff]
    %v123 = vld [vmem:[#allocation5 + $0x280] sm:$0xff]
    %v124 = vld [vmem:[#allocation5 + $0x288] sm:$0xff]
    %v125 = vld [vmem:[#allocation5 + $0x290] sm:$0xff]
    %v126 = vld [vmem:[#allocation5 + $0x298] sm:$0xff]
    %v127 = vld [vmem:[#allocation5 + $0x2a0] sm:$0xff]
    %v128 = vld [vmem:[#allocation5 + $0x2a8] sm:$0xff]
    %v129 = vld [vmem:[#allocation5 + $0x2b0] sm:$0xff]
    %v130 = vld [vmem:[#allocation5 + $0x2b8] sm:$0xff]
    %v131 = vld [vmem:[#allocation5 + $0x2c0] sm:$0xff]
    %v132 = vld [vmem:[#allocation5 + $0x2c8] sm:$0xff]
    %v133 = vld [vmem:[#allocation5 + $0x2d0] sm:$0xff]
    %v134 = vld [vmem:[#allocation5 + $0x2d8] sm:$0xff]
    %v135 = vld [vmem:[#allocation5 + $0x2e0] sm:$0xff]
    %v136 = vld [vmem:[#allocation5 + $0x2e8] sm:$0xff]
    %v137 = vld [vmem:[#allocation5 + $0x2f0] sm:$0xff]
    %v138 = vld [vmem:[#allocation5 + $0x2f8] sm:$0xff]
    %v139 = vld [vmem:[#allocation5 + $0x300] sm:$0xff]
    %v140 = vld [vmem:[#allocation5 + $0x308] sm:$0xff]
    %v141 = vld [vmem:[#allocation5 + $0x310] sm:$0xff]
    %v142 = vld [vmem:[#allocation5 + $0x318] sm:$0xff]
    %v143 = vld [vmem:[#allocation5 + $0x320] sm:$0xff]
    %v144 = vld [vmem:[#allocation5 + $0x328] sm:$0xff]
    %v145 = vld [vmem:[#allocation5 + $0x330] sm:$0xff]
    %v146 = vld [vmem:[#allocation5 + $0x338] sm:$0xff]
    %v147 = vld [vmem:[#allocation5 + $0x340] sm:$0xff]
    %v148 = vld [vmem:[#allocation5 + $0x348] sm:$0xff]
    %v149 = vld [vmem:[#allocation5 + $0x350] sm:$0xff]
    %v150 = vld [vmem:[#allocation5 + $0x358] sm:$0xff]
    %v151 = vld [vmem:[#allocation5 + $0x360] sm:$0xff]
    %v152 = vld [vmem:[#allocation5 + $0x368] sm:$0xff]
    %v153 = vld [vmem:[#allocation5 + $0x370] sm:$0xff]
    %v154 = vld [vmem:[#allocation5 + $0x378] sm:$0xff]
    %v155 = vld [vmem:[#allocation5 + $0x380] sm:$0xff]
    %v156 = vld [vmem:[#allocation5 + $0x388] sm:$0xff]
    %v157 = vld [vmem:[#allocation5 + $0x390] sm:$0xff]
    %v158 = vld [vmem:[#allocation5 + $0x398] sm:$0xff]
    %v159 = vld [vmem:[#allocation5 + $0x3a0] sm:$0xff]
    %v160 = vld [vmem:[#allocation5 + $0x3a8] sm:$0xff]
    %v161 = vld [vmem:[#allocation5 + $0x3b0] sm:$0xff]
    %v162 = vld [vmem:[#allocation5 + $0x3b8] sm:$0xff]
    %v163 = vld [vmem:[#allocation5 + $0x3c0] sm:$0xff]
    %v164 = vld [vmem:[#allocation5 + $0x3c8] sm:$0xff]
    %v165 = vld [vmem:[#allocation5 + $0x3d0] sm:$0xff]
    %v166 = vld [vmem:[#allocation5 + $0x3d8] sm:$0xff]
    %v167 = vld [vmem:[#allocation5 + $0x3e0] sm:$0xff]
    %v168 = vld [vmem:[#allocation5 + $0x3e8] sm:$0xff]
    %v169 = vld [vmem:[#allocation5 + $0x3f0] sm:$0xff]
    %v170 = vld [vmem:[#allocation5 + $0x3f8] sm:$0xff]
    %v171 = vld [vmem:[#allocation5 + $0x400] sm:$0xff]
    %v172 = vld [vmem:[#allocation5 + $0x408] sm:$0xff]
    %v173 = vld [vmem:[#allocation5 + $0x410] sm:$0xff]
    %v174 = vld [vmem:[#allocation5 + $0x418] sm:$0xff]
    %v175 = vld [vmem:[#allocation5 + $0x420] sm:$0xff]
    %v176 = vld [vmem:[#allocation5 + $0x428] sm:$0xff]
    %v177 = vld [vmem:[#allocation5 + $0x430] sm:$0xff]
    %v178 = vld [vmem:[#allocation5 + $0x438] sm:$0xff]
    %v179 = vld [vmem:[#allocation5 + $0x440] sm:$0xff]
    %v180 = vld [vmem:[#allocation5 + $0x448] sm:$0xff]
    %v181 = vld [vmem:[#allocation5 + $0x450] sm:$0xff]
    %v182 = vld [vmem:[#allocation5 + $0x458] sm:$0xff]
    %v183 = vld [vmem:[#allocation5 + $0x460] sm:$0xff]
    %v184 = vld [vmem:[#allocation5 + $0x468] sm:$0xff]
    %v185 = vld [vmem:[#allocation5 + $0x470] sm:$0xff]
    %v186 = vld [vmem:[#allocation5 + $0x478] sm:$0xff]
    %v188 = vperm.slane %v42, 0
    %v189 = vperm.slane %v42, 1
    %v190 = vperm.slane %v42, 2
    %v194 = vand.u32 %v88, 4294901760
    %195 = vmatpush.msra.mxu0 %v194
    %v196 = vand.u32 %v85, 4294901760
    %197 = vmatpush.msra.mxu0 %v196
    %v198 = vand.u32 %v82, 4294901760
    %199 = vmatpush.msra.mxu0 %v198
    %v200 = vand.u32 %v79, 4294901760
    %201 = vmatpush.msra.mxu0 %v200
    %v202 = vand.u32 %v76, 4294901760
    %203 = vmatpush.msra.mxu0 %v202
    %v204 = vand.u32 %v73, 4294901760
    %205 = vmatpush.msra.mxu0 %v204
    %v206 = vand.u32 %v70, 4294901760
    %207 = vmatpush.msra.mxu0 %v206
    %v208 = vand.u32 %v67, 4294901760
    %209 = vmatpush.msra.mxu0 %v208
    %v210 = vand.u32 %v64, 4294901760
    %211 = vmatpush.msra.mxu0 %v210
    %v212 = vand.u32 %v61, 4294901760
    %213 = vmatpush.msra.mxu0 %v212
    %v214 = vand.u32 %v58, 4294901760
    %215 = vmatpush.msra.mxu0 %v214
    %v216 = vand.u32 %v55, 4294901760
    %217 = vmatpush.msra.mxu0 %v216
    %v218 = vand.u32 %v52, 4294901760
    %219 = vmatpush.msra.mxu0 %v218
    %v220 = vand.u32 %v49, 4294901760
    %221 = vmatpush.msra.mxu0 %v220
    %v222 = vand.u32 %v46, 4294901760
    %223 = vmatpush.msra.mxu0 %v222
    %v224 = vand.u32 %v43, 4294901760
    %225 = vmatpush.msra.mxu0 %v224
    %v226 = vand.u32 %v188, 4294901760
    %v227 = vsub.f32 %v188, %v226
    %v228 = vand.u32 %v227, 4294901760
    %v229 = vsub.f32 %v227, %v228
    %v230 = vand.u32 %v229, 4294901760
    %231 = vmatmul.f32.gmra.mxu0 %v230
    %v232 = vpop.f32.mrf.mxu0
    %v233 = vadd.f32 0.0, %v232
    %234 = vdwg.mxu0
    %v235 = vand.u32 %v88, 4294901760
    %v236 = vsub.f32 %v88, %v235
    %v237 = vand.u32 %v236, 4294901760
    %v238 = vsub.f32 %v236, %v237
    %v239 = vand.u32 %v238, 4294901760
    %240 = vmatpush.msra.mxu0 %v239
    %v241 = vand.u32 %v85, 4294901760
    %v242 = vsub.f32 %v85, %v241
    %v243 = vand.u32 %v242, 4294901760
    %v244 = vsub.f32 %v242, %v243
    %v245 = vand.u32 %v244, 4294901760
    %246 = vmatpush.msra.mxu0 %v245
    %v247 = vand.u32 %v82, 4294901760
    %v248 = vsub.f32 %v82, %v247
    %v249 = vand.u32 %v248, 4294901760
    %v250 = vsub.f32 %v248, %v249
    %v251 = vand.u32 %v250, 4294901760
    %252 = vmatpush.msra.mxu0 %v251
    %v253 = vand.u32 %v79, 4294901760
    %v254 = vsub.f32 %v79, %v253
    %v255 = vand.u32 %v254, 4294901760
    %v256 = vsub.f32 %v254, %v255
    %v257 = vand.u32 %v256, 4294901760
    %258 = vmatpush.msra.mxu0 %v257
    %v259 = vand.u32 %v76, 4294901760
    %v260 = vsub.f32 %v76, %v259
    %v261 = vand.u32 %v260, 4294901760
    %v262 = vsub.f32 %v260, %v261
    %v263 = vand.u32 %v262, 4294901760
    %264 = vmatpush.msra.mxu0 %v263
    %v265 = vand.u32 %v73, 4294901760
    %v266 = vsub.f32 %v73, %v265
    %v267 = vand.u32 %v266, 4294901760
    %v268 = vsub.f32 %v266, %v267
    %v269 = vand.u32 %v268, 4294901760
    %270 = vmatpush.msra.mxu0 %v269
    %v271 = vand.u32 %v70, 4294901760
    %v272 = vsub.f32 %v70, %v271
    %v273 = vand.u32 %v272, 4294901760
    %v274 = vsub.f32 %v272, %v273
    %v275 = vand.u32 %v274, 4294901760
    %276 = vmatpush.msra.mxu0 %v275
    %v277 = vand.u32 %v67, 4294901760
    %v278 = vsub.f32 %v67, %v277
    %v279 = vand.u32 %v278, 4294901760
    %v280 = vsub.f32 %v278, %v279
    %v281 = vand.u32 %v280, 4294901760
    %282 = vmatpush.msra.mxu0 %v281
    %v283 = vand.u32 %v64, 4294901760
    %v284 = vsub.f32 %v64, %v283
    %v285 = vand.u32 %v284, 4294901760
    %v286 = vsub.f32 %v284, %v285
    %v287 = vand.u32 %v286, 4294901760
    %288 = vmatpush.msra.mxu0 %v287
    %v289 = vand.u32 %v61, 4294901760
    %v290 = vsub.f32 %v61, %v289
    %v291 = vand.u32 %v290, 4294901760
    %v292 = vsub.f32 %v290, %v291
    %v293 = vand.u32 %v292, 4294901760
    %294 = vmatpush.msra.mxu0 %v293
    %v295 = vand.u32 %v58, 4294901760
    %v296 = vsub.f32 %v58, %v295
    %v297 = vand.u32 %v296, 4294901760
    %v298 = vsub.f32 %v296, %v297
    %v299 = vand.u32 %v298, 4294901760
    %300 = vmatpush.msra.mxu0 %v299
    %v301 = vand.u32 %v55, 4294901760
    %v302 = vsub.f32 %v55, %v301
    %v303 = vand.u32 %v302, 4294901760
    %v304 = vsub.f32 %v302, %v303
    %v305 = vand.u32 %v304, 4294901760
    %306 = vmatpush.msra.mxu0 %v305
    %v307 = vand.u32 %v52, 4294901760
    %v308 = vsub.f32 %v52, %v307
    %v309 = vand.u32 %v308, 4294901760
    %v310 = vsub.f32 %v308, %v309
    %v311 = vand.u32 %v310, 4294901760
    %312 = vmatpush.msra.mxu0 %v311
    %v313 = vand.u32 %v49, 4294901760
    %v314 = vsub.f32 %v49, %v313
    %v315 = vand.u32 %v314, 4294901760
    %v316 = vsub.f32 %v314, %v315
    %v317 = vand.u32 %v316, 4294901760
    %318 = vmatpush.msra.mxu0 %v317
    %v319 = vand.u32 %v46, 4294901760
    %v320 = vsub.f32 %v46, %v319
    %v321 = vand.u32 %v320, 4294901760
    %v322 = vsub.f32 %v320, %v321
    %v323 = vand.u32 %v322, 4294901760
    %324 = vmatpush.msra.mxu0 %v323
    %v325 = vand.u32 %v43, 4294901760
    %v326 = vsub.f32 %v43, %v325
    %v327 = vand.u32 %v326, 4294901760
    %v328 = vsub.f32 %v326, %v327
    %v329 = vand.u32 %v328, 4294901760
    %330 = vmatpush.msra.mxu0 %v329
    %v331 = vand.u32 %v188, 4294901760
    %332 = vmatmul.f32.gmra.mxu0 %v331
    %v333 = vpop.f32.mrf.mxu0
    %v334 = vadd.f32 %v233, %v333
    %335 = vdwg.mxu0
    %v336 = vand.u32 %v88, 4294901760
    %v337 = vsub.f32 %v88, %v336
    %338 = vmatpush.msra.mxu0 %v337
    %v339 = vand.u32 %v85, 4294901760
    %v340 = vsub.f32 %v85, %v339
    %341 = vmatpush.msra.mxu0 %v340
    %v342 = vand.u32 %v82, 4294901760
    %v343 = vsub.f32 %v82, %v342
    %344 = vmatpush.msra.mxu0 %v343
    %v345 = vand.u32 %v79, 4294901760
    %v346 = vsub.f32 %v79, %v345
    %347 = vmatpush.msra.mxu0 %v346
    %v348 = vand.u32 %v76, 4294901760
    %v349 = vsub.f32 %v76, %v348
    %350 = vmatpush.msra.mxu0 %v349
    %v351 = vand.u32 %v73, 4294901760
    %v352 = vsub.f32 %v73, %v351
    %353 = vmatpush.msra.mxu0 %v352
    %v354 = vand.u32 %v70, 4294901760
    %v355 = vsub.f32 %v70, %v354
    %356 = vmatpush.msra.mxu0 %v355
    %v357 = vand.u32 %v67, 4294901760
    %v358 = vsub.f32 %v67, %v357
    %359 = vmatpush.msra.mxu0 %v358
    %v360 = vand.u32 %v64, 4294901760
    %v361 = vsub.f32 %v64, %v360
    %362 = vmatpush.msra.mxu0 %v361
    %v363 = vand.u32 %v61, 4294901760
    %v364 = vsub.f32 %v61, %v363
    %365 = vmatpush.msra.mxu0 %v364
    %v366 = vand.u32 %v58, 4294901760
    %v367 = vsub.f32 %v58, %v366
    %368 = vmatpush.msra.mxu0 %v367
    %v369 = vand.u32 %v55, 4294901760
    %v370 = vsub.f32 %v55, %v369
    %371 = vmatpush.msra.mxu0 %v370
    %v372 = vand.u32 %v52, 4294901760
    %v373 = vsub.f32 %v52, %v372
    %374 = vmatpush.msra.mxu0 %v373
    %v375 = vand.u32 %v49, 4294901760
    %v376 = vsub.f32 %v49, %v375
    %377 = vmatpush.msra.mxu0 %v376
    %v378 = vand.u32 %v46, 4294901760
    %v379 = vsub.f32 %v46, %v378
    %380 = vmatpush.msra.mxu0 %v379
    %v381 = vand.u32 %v43, 4294901760
    %v382 = vsub.f32 %v43, %v381
    %383 = vmatpush.msra.mxu0 %v382
    %v384 = vand.u32 %v188, 4294901760
    %v385 = vsub.f32 %v188, %v384
    %386 = vmatmul.f32.gmra.mxu0 %v385
    %v387 = vpop.f32.mrf.mxu0
    %v388 = vadd.f32 %v334, %v387
    %389 = vdwg.mxu0
    %v390 = vand.u32 %v88, 4294901760
    %391 = vmatpush.msra.mxu0 %v390
    %v392 = vand.u32 %v85, 4294901760
    %393 = vmatpush.msra.mxu0 %v392
    %v394 = vand.u32 %v82, 4294901760
    %395 = vmatpush.msra.mxu0 %v394
    %v396 = vand.u32 %v79, 4294901760
    %397 = vmatpush.msra.mxu0 %v396
    %v398 = vand.u32 %v76, 4294901760
    %399 = vmatpush.msra.mxu0 %v398
    %v400 = vand.u32 %v73, 4294901760
    %401 = vmatpush.msra.mxu0 %v400
    %v402 = vand.u32 %v70, 4294901760
    %403 = vmatpush.msra.mxu0 %v402
    %v404 = vand.u32 %v67, 4294901760
    %405 = vmatpush.msra.mxu0 %v404
    %v406 = vand.u32 %v64, 4294901760
    %407 = vmatpush.msra.mxu0 %v406
    %v408 = vand.u32 %v61, 4294901760
    %409 = vmatpush.msra.mxu0 %v408
    %v410 = vand.u32 %v58, 4294901760
    %411 = vmatpush.msra.mxu0 %v410
    %v412 = vand.u32 %v55, 4294901760
    %413 = vmatpush.msra.mxu0 %v412
    %v414 = vand.u32 %v52, 4294901760
    %415 = vmatpush.msra.mxu0 %v414
    %v416 = vand.u32 %v49, 4294901760
    %417 = vmatpush.msra.mxu0 %v416
    %v418 = vand.u32 %v46, 4294901760
    %419 = vmatpush.msra.mxu0 %v418
    %v420 = vand.u32 %v43, 4294901760
    %421 = vmatpush.msra.mxu0 %v420
    %v422 = vand.u32 %v188, 4294901760
    %v423 = vsub.f32 %v188, %v422
    %v424 = vand.u32 %v423, 4294901760
    %425 = vmatmul.f32.gmra.mxu0 %v424
    %v426 = vpop.f32.mrf.mxu0
    %v427 = vadd.f32 %v388, %v426
    %428 = vdwg.mxu0
    %v429 = vand.u32 %v88, 4294901760
    %v430 = vsub.f32 %v88, %v429
    %v431 = vand.u32 %v430, 4294901760
    %432 = vmatpush.msra.mxu0 %v431
    %v433 = vand.u32 %v85, 4294901760
    %v434 = vsub.f32 %v85, %v433
    %v435 = vand.u32 %v434, 4294901760
    %436 = vmatpush.msra.mxu0 %v435
    %v437 = vand.u32 %v82, 4294901760
    %v438 = vsub.f32 %v82, %v437
    %v439 = vand.u32 %v438, 4294901760
    %440 = vmatpush.msra.mxu0 %v439
    %v441 = vand.u32 %v79, 4294901760
    %v442 = vsub.f32 %v79, %v441
    %v443 = vand.u32 %v442, 4294901760
    %444 = vmatpush.msra.mxu0 %v443
    %v445 = vand.u32 %v76, 4294901760
    %v446 = vsub.f32 %v76, %v445
    %v447 = vand.u32 %v446, 4294901760
    %448 = vmatpush.msra.mxu0 %v447
    %v449 = vand.u32 %v73, 4294901760
    %v450 = vsub.f32 %v73, %v449
    %v451 = vand.u32 %v450, 4294901760
    %452 = vmatpush.msra.mxu0 %v451
    %v453 = vand.u32 %v70, 4294901760
    %v454 = vsub.f32 %v70, %v453
    %v455 = vand.u32 %v454, 4294901760
    %456 = vmatpush.msra.mxu0 %v455
    %v457 = vand.u32 %v67, 4294901760
    %v458 = vsub.f32 %v67, %v457
    %v459 = vand.u32 %v458, 4294901760
    %460 = vmatpush.msra.mxu0 %v459
    %v461 = vand.u32 %v64, 4294901760
    %v462 = vsub.f32 %v64, %v461
    %v463 = vand.u32 %v462, 4294901760
    %464 = vmatpush.msra.mxu0 %v463
    %v465 = vand.u32 %v61, 4294901760
    %v466 = vsub.f32 %v61, %v465
    %v467 = vand.u32 %v466, 4294901760
    %468 = vmatpush.msra.mxu0 %v467
    %v469 = vand.u32 %v58, 4294901760
    %v470 = vsub.f32 %v58, %v469
    %v471 = vand.u32 %v470, 4294901760
    %472 = vmatpush.msra.mxu0 %v471
    %v473 = vand.u32 %v55, 4294901760
    %v474 = vsub.f32 %v55, %v473
    %v475 = vand.u32 %v474, 4294901760
    %476 = vmatpush.msra.mxu0 %v475
    %v477 = vand.u32 %v52, 4294901760
    %v478 = vsub.f32 %v52, %v477
    %v479 = vand.u32 %v478, 4294901760
    %480 = vmatpush.msra.mxu0 %v479
    %v481 = vand.u32 %v49, 4294901760
    %v482 = vsub.f32 %v49, %v481
    %v483 = vand.u32 %v482, 4294901760
    %484 = vmatpush.msra.mxu0 %v483
    %v485 = vand.u32 %v46, 4294901760
    %v486 = vsub.f32 %v46, %v485
    %v487 = vand.u32 %v486, 4294901760
    %488 = vmatpush.msra.mxu0 %v487
    %v489 = vand.u32 %v43, 4294901760
    %v490 = vsub.f32 %v43, %v489
    %v491 = vand.u32 %v490, 4294901760
    %492 = vmatpush.msra.mxu0 %v491
    %v493 = vand.u32 %v188, 4294901760
    %494 = vmatmul.f32.gmra.mxu0 %v493
    %v495 = vpop.f32.mrf.mxu0
    %v496 = vadd.f32 %v427, %v495
    %497 = vdwg.mxu0
    %v498 = vand.u32 %v88, 4294901760
    %499 = vmatpush.msra.mxu0 %v498
    %v500 = vand.u32 %v85, 4294901760
    %501 = vmatpush.msra.mxu0 %v500
    %v502 = vand.u32 %v82, 4294901760
    %503 = vmatpush.msra.mxu0 %v502
    %v504 = vand.u32 %v79, 4294901760
    %505 = vmatpush.msra.mxu0 %v504
    %v506 = vand.u32 %v76, 4294901760
    %507 = vmatpush.msra.mxu0 %v506
    %v508 = vand.u32 %v73, 4294901760
    %509 = vmatpush.msra.mxu0 %v508
    %v510 = vand.u32 %v70, 4294901760
    %511 = vmatpush.msra.mxu0 %v510
    %v512 = vand.u32 %v67, 4294901760
    %513 = vmatpush.msra.mxu0 %v512
    %v514 = vand.u32 %v64, 4294901760
    %515 = vmatpush.msra.mxu0 %v514
    %v516 = vand.u32 %v61, 4294901760
    %517 = vmatpush.msra.mxu0 %v516
    %v518 = vand.u32 %v58, 4294901760
    %519 = vmatpush.msra.mxu0 %v518
    %v520 = vand.u32 %v55, 4294901760
    %521 = vmatpush.msra.mxu0 %v520
    %v522 = vand.u32 %v52, 4294901760
    %523 = vmatpush.msra.mxu0 %v522
    %v524 = vand.u32 %v49, 4294901760
    %525 = vmatpush.msra.mxu0 %v524
    %v526 = vand.u32 %v46, 4294901760
    %527 = vmatpush.msra.mxu0 %v526
    %v528 = vand.u32 %v43, 4294901760
    %529 = vmatpush.msra.mxu0 %v528
    %v530 = vand.u32 %v188, 4294901760
    %531 = vmatmul.f32.gmra.mxu0 %v530
    %v532 = vpop.f32.mrf.mxu0
    %v533 = vadd.f32 %v496, %v532
    %534 = vdwg.mxu0
    %v535 = vand.u32 %v136, 4294901760
    %536 = vmatpush.msra.mxu0 %v535
    %v537 = vand.u32 %v133, 4294901760
    %538 = vmatpush.msra.mxu0 %v537
    %v539 = vand.u32 %v130, 4294901760
    %540 = vmatpush.msra.mxu0 %v539
    %v541 = vand.u32 %v127, 4294901760
    %542 = vmatpush.msra.mxu0 %v541
    %v543 = vand.u32 %v124, 4294901760
    %544 = vmatpush.msra.mxu0 %v543
    %v545 = vand.u32 %v121, 4294901760
    %546 = vmatpush.msra.mxu0 %v545
    %v547 = vand.u32 %v118, 4294901760
    %548 = vmatpush.msra.mxu0 %v547
    %v549 = vand.u32 %v115, 4294901760
    %550 = vmatpush.msra.mxu0 %v549
    %v551 = vand.u32 %v112, 4294901760
    %552 = vmatpush.msra.mxu0 %v551
    %v553 = vand.u32 %v109, 4294901760
    %554 = vmatpush.msra.mxu0 %v553
    %v555 = vand.u32 %v106, 4294901760
    %556 = vmatpush.msra.mxu0 %v555
    %v557 = vand.u32 %v103, 4294901760
    %558 = vmatpush.msra.mxu0 %v557
    %v559 = vand.u32 %v100, 4294901760
    %560 = vmatpush.msra.mxu0 %v559
    %v561 = vand.u32 %v97, 4294901760
    %562 = vmatpush.msra.mxu0 %v561
    %v563 = vand.u32 %v94, 4294901760
    %564 = vmatpush.msra.mxu0 %v563
    %v565 = vand.u32 %v91, 4294901760
    %566 = vmatpush.msra.mxu0 %v565
    %v567 = vand.u32 %v189, 4294901760
    %v568 = vsub.f32 %v189, %v567
    %v569 = vand.u32 %v568, 4294901760
    %v570 = vsub.f32 %v568, %v569
    %v571 = vand.u32 %v570, 4294901760
    %572 = vmatmul.f32.gmra.mxu0 %v571
    %v573 = vpop.f32.mrf.mxu0
    %v574 = vadd.f32 %v533, %v573
    %575 = vdwg.mxu0
    %v576 = vand.u32 %v136, 4294901760
    %v577 = vsub.f32 %v136, %v576
    %v578 = vand.u32 %v577, 4294901760
    %v579 = vsub.f32 %v577, %v578
    %v580 = vand.u32 %v579, 4294901760
    %581 = vmatpush.msra.mxu0 %v580
    %v582 = vand.u32 %v133, 4294901760
    %v583 = vsub.f32 %v133, %v582
    %v584 = vand.u32 %v583, 4294901760
    %v585 = vsub.f32 %v583, %v584
    %v586 = vand.u32 %v585, 4294901760
    %587 = vmatpush.msra.mxu0 %v586
    %v588 = vand.u32 %v130, 4294901760
    %v589 = vsub.f32 %v130, %v588
    %v590 = vand.u32 %v589, 4294901760
    %v591 = vsub.f32 %v589, %v590
    %v592 = vand.u32 %v591, 4294901760
    %593 = vmatpush.msra.mxu0 %v592
    %v594 = vand.u32 %v127, 4294901760
    %v595 = vsub.f32 %v127, %v594
    %v596 = vand.u32 %v595, 4294901760
    %v597 = vsub.f32 %v595, %v596
    %v598 = vand.u32 %v597, 4294901760
    %599 = vmatpush.msra.mxu0 %v598
    %v600 = vand.u32 %v124, 4294901760
    %v601 = vsub.f32 %v124, %v600
    %v602 = vand.u32 %v601, 4294901760
    %v603 = vsub.f32 %v601, %v602
    %v604 = vand.u32 %v603, 4294901760
    %605 = vmatpush.msra.mxu0 %v604
    %v606 = vand.u32 %v121, 4294901760
    %v607 = vsub.f32 %v121, %v606
    %v608 = vand.u32 %v607, 4294901760
    %v609 = vsub.f32 %v607, %v608
    %v610 = vand.u32 %v609, 4294901760
    %611 = vmatpush.msra.mxu0 %v610
    %v612 = vand.u32 %v118, 4294901760
    %v613 = vsub.f32 %v118, %v612
    %v614 = vand.u32 %v613, 4294901760
    %v615 = vsub.f32 %v613, %v614
    %v616 = vand.u32 %v615, 4294901760
    %617 = vmatpush.msra.mxu0 %v616
    %v618 = vand.u32 %v115, 4294901760
    %v619 = vsub.f32 %v115, %v618
    %v620 = vand.u32 %v619, 4294901760
    %v621 = vsub.f32 %v619, %v620
    %v622 = vand.u32 %v621, 4294901760
    %623 = vmatpush.msra.mxu0 %v622
    %v624 = vand.u32 %v112, 4294901760
    %v625 = vsub.f32 %v112, %v624
    %v626 = vand.u32 %v625, 4294901760
    %v627 = vsub.f32 %v625, %v626
    %v628 = vand.u32 %v627, 4294901760
    %629 = vmatpush.msra.mxu0 %v628
    %v630 = vand.u32 %v109, 4294901760
    %v631 = vsub.f32 %v109, %v630
    %v632 = vand.u32 %v631, 4294901760
    %v633 = vsub.f32 %v631, %v632
    %v634 = vand.u32 %v633, 4294901760
    %635 = vmatpush.msra.mxu0 %v634
    %v636 = vand.u32 %v106, 4294901760
    %v637 = vsub.f32 %v106, %v636
    %v638 = vand.u32 %v637, 4294901760
    %v639 = vsub.f32 %v637, %v638
    %v640 = vand.u32 %v639, 4294901760
    %641 = vmatpush.msra.mxu0 %v640
    %v642 = vand.u32 %v103, 4294901760
    %v643 = vsub.f32 %v103, %v642
    %v644 = vand.u32 %v643, 4294901760
    %v645 = vsub.f32 %v643, %v644
    %v646 = vand.u32 %v645, 4294901760
    %647 = vmatpush.msra.mxu0 %v646
    %v648 = vand.u32 %v100, 4294901760
    %v649 = vsub.f32 %v100, %v648
    %v650 = vand.u32 %v649, 4294901760
    %v651 = vsub.f32 %v649, %v650
    %v652 = vand.u32 %v651, 4294901760
    %653 = vmatpush.msra.mxu0 %v652
    %v654 = vand.u32 %v97, 4294901760
    %v655 = vsub.f32 %v97, %v654
    %v656 = vand.u32 %v655, 4294901760
    %v657 = vsub.f32 %v655, %v656
    %v658 = vand.u32 %v657, 4294901760
    %659 = vmatpush.msra.mxu0 %v658
    %v660 = vand.u32 %v94, 4294901760
    %v661 = vsub.f32 %v94, %v660
    %v662 = vand.u32 %v661, 4294901760
    %v663 = vsub.f32 %v661, %v662
    %v664 = vand.u32 %v663, 4294901760
    %665 = vmatpush.msra.mxu0 %v664
    %v666 = vand.u32 %v91, 4294901760
    %v667 = vsub.f32 %v91, %v666
    %v668 = vand.u32 %v667, 4294901760
    %v669 = vsub.f32 %v667, %v668
    %v670 = vand.u32 %v669, 4294901760
    %671 = vmatpush.msra.mxu0 %v670
    %v672 = vand.u32 %v189, 4294901760
    %673 = vmatmul.f32.gmra.mxu0 %v672
    %v674 = vpop.f32.mrf.mxu0
    %v675 = vadd.f32 %v574, %v674
    %676 = vdwg.mxu0
    %v677 = vand.u32 %v136, 4294901760
    %v678 = vsub.f32 %v136, %v677
    %679 = vmatpush.msra.mxu0 %v678
    %v680 = vand.u32 %v133, 4294901760
    %v681 = vsub.f32 %v133, %v680
    %682 = vmatpush.msra.mxu0 %v681
    %v683 = vand.u32 %v130, 4294901760
    %v684 = vsub.f32 %v130, %v683
    %685 = vmatpush.msra.mxu0 %v684
    %v686 = vand.u32 %v127, 4294901760
    %v687 = vsub.f32 %v127, %v686
    %688 = vmatpush.msra.mxu0 %v687
    %v689 = vand.u32 %v124, 4294901760
    %v690 = vsub.f32 %v124, %v689
    %691 = vmatpush.msra.mxu0 %v690
    %v692 = vand.u32 %v121, 4294901760
    %v693 = vsub.f32 %v121, %v692
    %694 = vmatpush.msra.mxu0 %v693
    %v695 = vand.u32 %v118, 4294901760
    %v696 = vsub.f32 %v118, %v695
    %697 = vmatpush.msra.mxu0 %v696
    %v698 = vand.u32 %v115, 4294901760
    %v699 = vsub.f32 %v115, %v698
    %700 = vmatpush.msra.mxu0 %v699
    %v701 = vand.u32 %v112, 4294901760
    %v702 = vsub.f32 %v112, %v701
    %703 = vmatpush.msra.mxu0 %v702
    %v704 = vand.u32 %v109, 4294901760
    %v705 = vsub.f32 %v109, %v704
    %706 = vmatpush.msra.mxu0 %v705
    %v707 = vand.u32 %v106, 4294901760
    %v708 = vsub.f32 %v106, %v707
    %709 = vmatpush.msra.mxu0 %v708
    %v710 = vand.u32 %v103, 4294901760
    %v711 = vsub.f32 %v103, %v710
    %712 = vmatpush.msra.mxu0 %v711
    %v713 = vand.u32 %v100, 4294901760
    %v714 = vsub.f32 %v100, %v713
    %715 = vmatpush.msra.mxu0 %v714
    %v716 = vand.u32 %v97, 4294901760
    %v717 = vsub.f32 %v97, %v716
    %718 = vmatpush.msra.mxu0 %v717
    %v719 = vand.u32 %v94, 4294901760
    %v720 = vsub.f32 %v94, %v719
    %721 = vmatpush.msra.mxu0 %v720
    %v722 = vand.u32 %v91, 4294901760
    %v723 = vsub.f32 %v91, %v722
    %724 = vmatpush.msra.mxu0 %v723
    %v725 = vand.u32 %v189, 4294901760
    %v726 = vsub.f32 %v189, %v725
    %727 = vmatmul.f32.gmra.mxu0 %v726
    %v728 = vpop.f32.mrf.mxu0
    %v729 = vadd.f32 %v675, %v728
    %730 = vdwg.mxu0
    %v731 = vand.u32 %v136, 4294901760
    %732 = vmatpush.msra.mxu0 %v731
    %v733 = vand.u32 %v133, 4294901760
    %734 = vmatpush.msra.mxu0 %v733
    %v735 = vand.u32 %v130, 4294901760
    %736 = vmatpush.msra.mxu0 %v735
    %v737 = vand.u32 %v127, 4294901760
    %738 = vmatpush.msra.mxu0 %v737
    %v739 = vand.u32 %v124, 4294901760
    %740 = vmatpush.msra.mxu0 %v739
    %v741 = vand.u32 %v121, 4294901760
    %742 = vmatpush.msra.mxu0 %v741
    %v743 = vand.u32 %v118, 4294901760
    %744 = vmatpush.msra.mxu0 %v743
    %v745 = vand.u32 %v115, 4294901760
    %746 = vmatpush.msra.mxu0 %v745
    %v747 = vand.u32 %v112, 4294901760
    %748 = vmatpush.msra.mxu0 %v747
    %v749 = vand.u32 %v109, 4294901760
    %750 = vmatpush.msra.mxu0 %v749
    %v751 = vand.u32 %v106, 4294901760
    %752 = vmatpush.msra.mxu0 %v751
    %v753 = vand.u32 %v103, 4294901760
    %754 = vmatpush.msra.mxu0 %v753
    %v755 = vand.u32 %v100, 4294901760
    %756 = vmatpush.msra.mxu0 %v755
    %v757 = vand.u32 %v97, 4294901760
    %758 = vmatpush.msra.mxu0 %v757
    %v759 = vand.u32 %v94, 4294901760
    %760 = vmatpush.msra.mxu0 %v759
    %v761 = vand.u32 %v91, 4294901760
    %762 = vmatpush.msra.mxu0 %v761
    %v763 = vand.u32 %v189, 4294901760
    %v764 = vsub.f32 %v189, %v763
    %v765 = vand.u32 %v764, 4294901760
    %766 = vmatmul.f32.gmra.mxu0 %v765
    %v767 = vpop.f32.mrf.mxu0
    %v768 = vadd.f32 %v729, %v767
    %769 = vdwg.mxu0
    %v770 = vand.u32 %v136, 4294901760
    %v771 = vsub.f32 %v136, %v770
    %v772 = vand.u32 %v771, 4294901760
    %773 = vmatpush.msra.mxu0 %v772
    %v774 = vand.u32 %v133, 4294901760
    %v775 = vsub.f32 %v133, %v774
    %v776 = vand.u32 %v775, 4294901760
    %777 = vmatpush.msra.mxu0 %v776
    %v778 = vand.u32 %v130, 4294901760
    %v779 = vsub.f32 %v130, %v778
    %v780 = vand.u32 %v779, 4294901760
    %781 = vmatpush.msra.mxu0 %v780
    %v782 = vand.u32 %v127, 4294901760
    %v783 = vsub.f32 %v127, %v782
    %v784 = vand.u32 %v783, 4294901760
    %785 = vmatpush.msra.mxu0 %v784
    %v786 = vand.u32 %v124, 4294901760
    %v787 = vsub.f32 %v124, %v786
    %v788 = vand.u32 %v787, 4294901760
    %789 = vmatpush.msra.mxu0 %v788
    %v790 = vand.u32 %v121, 4294901760
    %v791 = vsub.f32 %v121, %v790
    %v792 = vand.u32 %v791, 4294901760
    %793 = vmatpush.msra.mxu0 %v792
    %v794 = vand.u32 %v118, 4294901760
    %v795 = vsub.f32 %v118, %v794
    %v796 = vand.u32 %v795, 4294901760
    %797 = vmatpush.msra.mxu0 %v796
    %v798 = vand.u32 %v115, 4294901760
    %v799 = vsub.f32 %v115, %v798
    %v800 = vand.u32 %v799, 4294901760
    %801 = vmatpush.msra.mxu0 %v800
    %v802 = vand.u32 %v112, 4294901760
    %v803 = vsub.f32 %v112, %v802
    %v804 = vand.u32 %v803, 4294901760
    %805 = vmatpush.msra.mxu0 %v804
    %v806 = vand.u32 %v109, 4294901760
    %v807 = vsub.f32 %v109, %v806
    %v808 = vand.u32 %v807, 4294901760
    %809 = vmatpush.msra.mxu0 %v808
    %v810 = vand.u32 %v106, 4294901760
    %v811 = vsub.f32 %v106, %v810
    %v812 = vand.u32 %v811, 4294901760
    %813 = vmatpush.msra.mxu0 %v812
    %v814 = vand.u32 %v103, 4294901760
    %v815 = vsub.f32 %v103, %v814
    %v816 = vand.u32 %v815, 4294901760
    %817 = vmatpush.msra.mxu0 %v816
    %v818 = vand.u32 %v100, 4294901760
    %v819 = vsub.f32 %v100, %v818
    %v820 = vand.u32 %v819, 4294901760
    %821 = vmatpush.msra.mxu0 %v820
    %v822 = vand.u32 %v97, 4294901760
    %v823 = vsub.f32 %v97, %v822
    %v824 = vand.u32 %v823, 4294901760
    %825 = vmatpush.msra.mxu0 %v824
    %v826 = vand.u32 %v94, 4294901760
    %v827 = vsub.f32 %v94, %v826
    %v828 = vand.u32 %v827, 4294901760
    %829 = vmatpush.msra.mxu0 %v828
    %v830 = vand.u32 %v91, 4294901760
    %v831 = vsub.f32 %v91, %v830
    %v832 = vand.u32 %v831, 4294901760
    %833 = vmatpush.msra.mxu0 %v832
    %v834 = vand.u32 %v189, 4294901760
    %835 = vmatmul.f32.gmra.mxu0 %v834
    %v836 = vpop.f32.mrf.mxu0
    %v837 = vadd.f32 %v768, %v836
    %838 = vdwg.mxu0
    %v839 = vand.u32 %v136, 4294901760
    %840 = vmatpush.msra.mxu0 %v839
    %v841 = vand.u32 %v133, 4294901760
    %842 = vmatpush.msra.mxu0 %v841
    %v843 = vand.u32 %v130, 4294901760
    %844 = vmatpush.msra.mxu0 %v843
    %v845 = vand.u32 %v127, 4294901760
    %846 = vmatpush.msra.mxu0 %v845
    %v847 = vand.u32 %v124, 4294901760
    %848 = vmatpush.msra.mxu0 %v847
    %v849 = vand.u32 %v121, 4294901760
    %850 = vmatpush.msra.mxu0 %v849
    %v851 = vand.u32 %v118, 4294901760
    %852 = vmatpush.msra.mxu0 %v851
    %v853 = vand.u32 %v115, 4294901760
    %854 = vmatpush.msra.mxu0 %v853
    %v855 = vand.u32 %v112, 4294901760
    %856 = vmatpush.msra.mxu0 %v855
    %v857 = vand.u32 %v109, 4294901760
    %858 = vmatpush.msra.mxu0 %v857
    %v859 = vand.u32 %v106, 4294901760
    %860 = vmatpush.msra.mxu0 %v859
    %v861 = vand.u32 %v103, 4294901760
    %862 = vmatpush.msra.mxu0 %v861
    %v863 = vand.u32 %v100, 4294901760
    %864 = vmatpush.msra.mxu0 %v863
    %v865 = vand.u32 %v97, 4294901760
    %866 = vmatpush.msra.mxu0 %v865
    %v867 = vand.u32 %v94, 4294901760
    %868 = vmatpush.msra.mxu0 %v867
    %v869 = vand.u32 %v91, 4294901760
    %870 = vmatpush.msra.mxu0 %v869
    %v871 = vand.u32 %v189, 4294901760
    %872 = vmatmul.f32.gmra.mxu0 %v871
    %v873 = vpop.f32.mrf.mxu0
    %v874 = vadd.f32 %v837, %v873
    %875 = vdwg.mxu0
    %v876 = vand.u32 %v184, 4294901760
    %877 = vmatpush.msra.mxu0 %v876
    %v878 = vand.u32 %v181, 4294901760
    %879 = vmatpush.msra.mxu0 %v878
    %v880 = vand.u32 %v178, 4294901760
    %881 = vmatpush.msra.mxu0 %v880
    %v882 = vand.u32 %v175, 4294901760
    %883 = vmatpush.msra.mxu0 %v882
    %v884 = vand.u32 %v172, 4294901760
    %885 = vmatpush.msra.mxu0 %v884
    %v886 = vand.u32 %v169, 4294901760
    %887 = vmatpush.msra.mxu0 %v886
    %v888 = vand.u32 %v166, 4294901760
    %889 = vmatpush.msra.mxu0 %v888
    %v890 = vand.u32 %v163, 4294901760
    %891 = vmatpush.msra.mxu0 %v890
    %v892 = vand.u32 %v160, 4294901760
    %893 = vmatpush.msra.mxu0 %v892
    %v894 = vand.u32 %v157, 4294901760
    %895 = vmatpush.msra.mxu0 %v894
    %v896 = vand.u32 %v154, 4294901760
    %897 = vmatpush.msra.mxu0 %v896
    %v898 = vand.u32 %v151, 4294901760
    %899 = vmatpush.msra.mxu0 %v898
    %v900 = vand.u32 %v148, 4294901760
    %901 = vmatpush.msra.mxu0 %v900
    %v902 = vand.u32 %v145, 4294901760
    %903 = vmatpush.msra.mxu0 %v902
    %v904 = vand.u32 %v142, 4294901760
    %905 = vmatpush.msra.mxu0 %v904
    %v906 = vand.u32 %v139, 4294901760
    %907 = vmatpush.msra.mxu0 %v906
    %v908 = vand.u32 %v190, 4294901760
    %v909 = vsub.f32 %v190, %v908
    %v910 = vand.u32 %v909, 4294901760
    %v911 = vsub.f32 %v909, %v910
    %v912 = vand.u32 %v911, 4294901760
    %913 = vmatmul.f32.gmra.mxu0 %v912
    %v914 = vpop.f32.mrf.mxu0
    %v915 = vadd.f32 %v874, %v914
    %916 = vdwg.mxu0
    %v917 = vand.u32 %v184, 4294901760
    %v918 = vsub.f32 %v184, %v917
    %v919 = vand.u32 %v918, 4294901760
    %v920 = vsub.f32 %v918, %v919
    %v921 = vand.u32 %v920, 4294901760
    %922 = vmatpush.msra.mxu0 %v921
    %v923 = vand.u32 %v181, 4294901760
    %v924 = vsub.f32 %v181, %v923
    %v925 = vand.u32 %v924, 4294901760
    %v926 = vsub.f32 %v924, %v925
    %v927 = vand.u32 %v926, 4294901760
    %928 = vmatpush.msra.mxu0 %v927
    %v929 = vand.u32 %v178, 4294901760
    %v930 = vsub.f32 %v178, %v929
    %v931 = vand.u32 %v930, 4294901760
    %v932 = vsub.f32 %v930, %v931
    %v933 = vand.u32 %v932, 4294901760
    %934 = vmatpush.msra.mxu0 %v933
    %v935 = vand.u32 %v175, 4294901760
    %v936 = vsub.f32 %v175, %v935
    %v937 = vand.u32 %v936, 4294901760
    %v938 = vsub.f32 %v936, %v937
    %v939 = vand.u32 %v938, 4294901760
    %940 = vmatpush.msra.mxu0 %v939
    %v941 = vand.u32 %v172, 4294901760
    %v942 = vsub.f32 %v172, %v941
    %v943 = vand.u32 %v942, 4294901760
    %v944 = vsub.f32 %v942, %v943
    %v945 = vand.u32 %v944, 4294901760
    %946 = vmatpush.msra.mxu0 %v945
    %v947 = vand.u32 %v169, 4294901760
    %v948 = vsub.f32 %v169, %v947
    %v949 = vand.u32 %v948, 4294901760
    %v950 = vsub.f32 %v948, %v949
    %v951 = vand.u32 %v950, 4294901760
    %952 = vmatpush.msra.mxu0 %v951
    %v953 = vand.u32 %v166, 4294901760
    %v954 = vsub.f32 %v166, %v953
    %v955 = vand.u32 %v954, 4294901760
    %v956 = vsub.f32 %v954, %v955
    %v957 = vand.u32 %v956, 4294901760
    %958 = vmatpush.msra.mxu0 %v957
    %v959 = vand.u32 %v163, 4294901760
    %v960 = vsub.f32 %v163, %v959
    %v961 = vand.u32 %v960, 4294901760
    %v962 = vsub.f32 %v960, %v961
    %v963 = vand.u32 %v962, 4294901760
    %964 = vmatpush.msra.mxu0 %v963
    %v965 = vand.u32 %v160, 4294901760
    %v966 = vsub.f32 %v160, %v965
    %v967 = vand.u32 %v966, 4294901760
    %v968 = vsub.f32 %v966, %v967
    %v969 = vand.u32 %v968, 4294901760
    %970 = vmatpush.msra.mxu0 %v969
    %v971 = vand.u32 %v157, 4294901760
    %v972 = vsub.f32 %v157, %v971
    %v973 = vand.u32 %v972, 4294901760
    %v974 = vsub.f32 %v972, %v973
    %v975 = vand.u32 %v974, 4294901760
    %976 = vmatpush.msra.mxu0 %v975
    %v977 = vand.u32 %v154, 4294901760
    %v978 = vsub.f32 %v154, %v977
    %v979 = vand.u32 %v978, 4294901760
    %v980 = vsub.f32 %v978, %v979
    %v981 = vand.u32 %v980, 4294901760
    %982 = vmatpush.msra.mxu0 %v981
    %v983 = vand.u32 %v151, 4294901760
    %v984 = vsub.f32 %v151, %v983
    %v985 = vand.u32 %v984, 4294901760
    %v986 = vsub.f32 %v984, %v985
    %v987 = vand.u32 %v986, 4294901760
    %988 = vmatpush.msra.mxu0 %v987
    %v989 = vand.u32 %v148, 4294901760
    %v990 = vsub.f32 %v148, %v989
    %v991 = vand.u32 %v990, 4294901760
    %v992 = vsub.f32 %v990, %v991
    %v993 = vand.u32 %v992, 4294901760
    %994 = vmatpush.msra.mxu0 %v993
    %v995 = vand.u32 %v145, 4294901760
    %v996 = vsub.f32 %v145, %v995
    %v997 = vand.u32 %v996, 4294901760
    %v998 = vsub.f32 %v996, %v997
    %v999 = vand.u32 %v998, 4294901760
    %1000 = vmatpush.msra.mxu0 %v999
    %v1001 = vand.u32 %v142, 4294901760
    %v1002 = vsub.f32 %v142, %v1001
    %v1003 = vand.u32 %v1002, 4294901760
    %v1004 = vsub.f32 %v1002, %v1003
    %v1005 = vand.u32 %v1004, 4294901760
    %1006 = vmatpush.msra.mxu0 %v1005
    %v1007 = vand.u32 %v139, 4294901760
    %v1008 = vsub.f32 %v139, %v1007
    %v1009 = vand.u32 %v1008, 4294901760
    %v1010 = vsub.f32 %v1008, %v1009
    %v1011 = vand.u32 %v1010, 4294901760
    %1012 = vmatpush.msra.mxu0 %v1011
    %v1013 = vand.u32 %v190, 4294901760
    %1014 = vmatmul.f32.gmra.mxu0 %v1013
    %v1015 = vpop.f32.mrf.mxu0
    %v1016 = vadd.f32 %v915, %v1015
    %1017 = vdwg.mxu0
    %v1018 = vand.u32 %v184, 4294901760
    %v1019 = vsub.f32 %v184, %v1018
    %1020 = vmatpush.msra.mxu0 %v1019
    %v1021 = vand.u32 %v181, 4294901760
    %v1022 = vsub.f32 %v181, %v1021
    %1023 = vmatpush.msra.mxu0 %v1022
    %v1024 = vand.u32 %v178, 4294901760
    %v1025 = vsub.f32 %v178, %v1024
    %1026 = vmatpush.msra.mxu0 %v1025
    %v1027 = vand.u32 %v175, 4294901760
    %v1028 = vsub.f32 %v175, %v1027
    %1029 = vmatpush.msra.mxu0 %v1028
    %v1030 = vand.u32 %v172, 4294901760
    %v1031 = vsub.f32 %v172, %v1030
    %1032 = vmatpush.msra.mxu0 %v1031
    %v1033 = vand.u32 %v169, 4294901760
    %v1034 = vsub.f32 %v169, %v1033
    %1035 = vmatpush.msra.mxu0 %v1034
    %v1036 = vand.u32 %v166, 4294901760
    %v1037 = vsub.f32 %v166, %v1036
    %1038 = vmatpush.msra.mxu0 %v1037
    %v1039 = vand.u32 %v163, 4294901760
    %v1040 = vsub.f32 %v163, %v1039
    %1041 = vmatpush.msra.mxu0 %v1040
    %v1042 = vand.u32 %v160, 4294901760
    %v1043 = vsub.f32 %v160, %v1042
    %1044 = vmatpush.msra.mxu0 %v1043
    %v1045 = vand.u32 %v157, 4294901760
    %v1046 = vsub.f32 %v157, %v1045
    %1047 = vmatpush.msra.mxu0 %v1046
    %v1048 = vand.u32 %v154, 4294901760
    %v1049 = vsub.f32 %v154, %v1048
    %1050 = vmatpush.msra.mxu0 %v1049
    %v1051 = vand.u32 %v151, 4294901760
    %v1052 = vsub.f32 %v151, %v1051
    %1053 = vmatpush.msra.mxu0 %v1052
    %v1054 = vand.u32 %v148, 4294901760
    %v1055 = vsub.f32 %v148, %v1054
    %1056 = vmatpush.msra.mxu0 %v1055
    %v1057 = vand.u32 %v145, 4294901760
    %v1058 = vsub.f32 %v145, %v1057
    %1059 = vmatpush.msra.mxu0 %v1058
    %v1060 = vand.u32 %v142, 4294901760
    %v1061 = vsub.f32 %v142, %v1060
    %1062 = vmatpush.msra.mxu0 %v1061
    %v1063 = vand.u32 %v139, 4294901760
    %v1064 = vsub.f32 %v139, %v1063
    %1065 = vmatpush.msra.mxu0 %v1064
    %v1066 = vand.u32 %v190, 4294901760
    %v1067 = vsub.f32 %v190, %v1066
    %1068 = vmatmul.f32.gmra.mxu0 %v1067
    %v1069 = vpop.f32.mrf.mxu0
    %v1070 = vadd.f32 %v1016, %v1069
    %1071 = vdwg.mxu0
    %v1072 = vand.u32 %v184, 4294901760
    %1073 = vmatpush.msra.mxu0 %v1072
    %v1074 = vand.u32 %v181, 4294901760
    %1075 = vmatpush.msra.mxu0 %v1074
    %v1076 = vand.u32 %v178, 4294901760
    %1077 = vmatpush.msra.mxu0 %v1076
    %v1078 = vand.u32 %v175, 4294901760
    %1079 = vmatpush.msra.mxu0 %v1078
    %v1080 = vand.u32 %v172, 4294901760
    %1081 = vmatpush.msra.mxu0 %v1080
    %v1082 = vand.u32 %v169, 4294901760
    %1083 = vmatpush.msra.mxu0 %v1082
    %v1084 = vand.u32 %v166, 4294901760
    %1085 = vmatpush.msra.mxu0 %v1084
    %v1086 = vand.u32 %v163, 4294901760
    %1087 = vmatpush.msra.mxu0 %v1086
    %v1088 = vand.u32 %v160, 4294901760
    %1089 = vmatpush.msra.mxu0 %v1088
    %v1090 = vand.u32 %v157, 4294901760
    %1091 = vmatpush.msra.mxu0 %v1090
    %v1092 = vand.u32 %v154, 4294901760
    %1093 = vmatpush.msra.mxu0 %v1092
    %v1094 = vand.u32 %v151, 4294901760
    %1095 = vmatpush.msra.mxu0 %v1094
    %v1096 = vand.u32 %v148, 4294901760
    %1097 = vmatpush.msra.mxu0 %v1096
    %v1098 = vand.u32 %v145, 4294901760
    %1099 = vmatpush.msra.mxu0 %v1098
    %v1100 = vand.u32 %v142, 4294901760
    %1101 = vmatpush.msra.mxu0 %v1100
    %v1102 = vand.u32 %v139, 4294901760
    %1103 = vmatpush.msra.mxu0 %v1102
    %v1104 = vand.u32 %v190, 4294901760
    %v1105 = vsub.f32 %v190, %v1104
    %v1106 = vand.u32 %v1105, 4294901760
    %1107 = vmatmul.f32.gmra.mxu0 %v1106
    %v1108 = vpop.f32.mrf.mxu0
    %v1109 = vadd.f32 %v1070, %v1108
    %1110 = vdwg.mxu0
    %v1111 = vand.u32 %v184, 4294901760
    %v1112 = vsub.f32 %v184, %v1111
    %v1113 = vand.u32 %v1112, 4294901760
    %1114 = vmatpush.msra.mxu0 %v1113
    %v1115 = vand.u32 %v181, 4294901760
    %v1116 = vsub.f32 %v181, %v1115
    %v1117 = vand.u32 %v1116, 4294901760
    %1118 = vmatpush.msra.mxu0 %v1117
    %v1119 = vand.u32 %v178, 4294901760
    %v1120 = vsub.f32 %v178, %v1119
    %v1121 = vand.u32 %v1120, 4294901760
    %1122 = vmatpush.msra.mxu0 %v1121
    %v1123 = vand.u32 %v175, 4294901760
    %v1124 = vsub.f32 %v175, %v1123
    %v1125 = vand.u32 %v1124, 4294901760
    %1126 = vmatpush.msra.mxu0 %v1125
    %v1127 = vand.u32 %v172, 4294901760
    %v1128 = vsub.f32 %v172, %v1127
    %v1129 = vand.u32 %v1128, 4294901760
    %1130 = vmatpush.msra.mxu0 %v1129
    %v1131 = vand.u32 %v169, 4294901760
    %v1132 = vsub.f32 %v169, %v1131
    %v1133 = vand.u32 %v1132, 4294901760
    %1134 = vmatpush.msra.mxu0 %v1133
    %v1135 = vand.u32 %v166, 4294901760
    %v1136 = vsub.f32 %v166, %v1135
    %v1137 = vand.u32 %v1136, 4294901760
    %1138 = vmatpush.msra.mxu0 %v1137
    %v1139 = vand.u32 %v163, 4294901760
    %v1140 = vsub.f32 %v163, %v1139
    %v1141 = vand.u32 %v1140, 4294901760
    %1142 = vmatpush.msra.mxu0 %v1141
    %v1143 = vand.u32 %v160, 4294901760
    %v1144 = vsub.f32 %v160, %v1143
    %v1145 = vand.u32 %v1144, 4294901760
    %1146 = vmatpush.msra.mxu0 %v1145
    %v1147 = vand.u32 %v157, 4294901760
    %v1148 = vsub.f32 %v157, %v1147
    %v1149 = vand.u32 %v1148, 4294901760
    %1150 = vmatpush.msra.mxu0 %v1149
    %v1151 = vand.u32 %v154, 4294901760
    %v1152 = vsub.f32 %v154, %v1151
    %v1153 = vand.u32 %v1152, 4294901760
    %1154 = vmatpush.msra.mxu0 %v1153
    %v1155 = vand.u32 %v151, 4294901760
    %v1156 = vsub.f32 %v151, %v1155
    %v1157 = vand.u32 %v1156, 4294901760
    %1158 = vmatpush.msra.mxu0 %v1157
    %v1159 = vand.u32 %v148, 4294901760
    %v1160 = vsub.f32 %v148, %v1159
    %v1161 = vand.u32 %v1160, 4294901760
    %1162 = vmatpush.msra.mxu0 %v1161
    %v1163 = vand.u32 %v145, 4294901760
    %v1164 = vsub.f32 %v145, %v1163
    %v1165 = vand.u32 %v1164, 4294901760
    %1166 = vmatpush.msra.mxu0 %v1165
    %v1167 = vand.u32 %v142, 4294901760
    %v1168 = vsub.f32 %v142, %v1167
    %v1169 = vand.u32 %v1168, 4294901760
    %1170 = vmatpush.msra.mxu0 %v1169
    %v1171 = vand.u32 %v139, 4294901760
    %v1172 = vsub.f32 %v139, %v1171
    %v1173 = vand.u32 %v1172, 4294901760
    %1174 = vmatpush.msra.mxu0 %v1173
    %v1175 = vand.u32 %v190, 4294901760
    %1176 = vmatmul.f32.gmra.mxu0 %v1175
    %v1177 = vpop.f32.mrf.mxu0
    %v1178 = vadd.f32 %v1109, %v1177
    %1179 = vdwg.mxu0
    %v1180 = vand.u32 %v184, 4294901760
    %1181 = vmatpush.msra.mxu0 %v1180
    %v1182 = vand.u32 %v181, 4294901760
    %1183 = vmatpush.msra.mxu0 %v1182
    %v1184 = vand.u32 %v178, 4294901760
    %1185 = vmatpush.msra.mxu0 %v1184
    %v1186 = vand.u32 %v175, 4294901760
    %1187 = vmatpush.msra.mxu0 %v1186
    %v1188 = vand.u32 %v172, 4294901760
    %1189 = vmatpush.msra.mxu0 %v1188
    %v1190 = vand.u32 %v169, 4294901760
    %1191 = vmatpush.msra.mxu0 %v1190
    %v1192 = vand.u32 %v166, 4294901760
    %1193 = vmatpush.msra.mxu0 %v1192
    %v1194 = vand.u32 %v163, 4294901760
    %1195 = vmatpush.msra.mxu0 %v1194
    %v1196 = vand.u32 %v160, 4294901760
    %1197 = vmatpush.msra.mxu0 %v1196
    %v1198 = vand.u32 %v157, 4294901760
    %1199 = vmatpush.msra.mxu0 %v1198
    %v1200 = vand.u32 %v154, 4294901760
    %1201 = vmatpush.msra.mxu0 %v1200
    %v1202 = vand.u32 %v151, 4294901760
    %1203 = vmatpush.msra.mxu0 %v1202
    %v1204 = vand.u32 %v148, 4294901760
    %1205 = vmatpush.msra.mxu0 %v1204
    %v1206 = vand.u32 %v145, 4294901760
    %1207 = vmatpush.msra.mxu0 %v1206
    %v1208 = vand.u32 %v142, 4294901760
    %1209 = vmatpush.msra.mxu0 %v1208
    %v1210 = vand.u32 %v139, 4294901760
    %1211 = vmatpush.msra.mxu0 %v1210
    %v1212 = vand.u32 %v190, 4294901760
    %1213 = vmatmul.f32.gmra.mxu0 %v1212
    %v1214 = vpop.f32.mrf.mxu0
    %v1215 = vadd.f32 %v1178, %v1214
    %1216 = vdwg.mxu0
    %v1217 = vand.u32 %v89, 4294901760
    %1218 = vmatpush.msra.mxu0 %v1217
    %v1219 = vand.u32 %v86, 4294901760
    %1220 = vmatpush.msra.mxu0 %v1219
    %v1221 = vand.u32 %v83, 4294901760
    %1222 = vmatpush.msra.mxu0 %v1221
    %v1223 = vand.u32 %v80, 4294901760
    %1224 = vmatpush.msra.mxu0 %v1223
    %v1225 = vand.u32 %v77, 4294901760
    %1226 = vmatpush.msra.mxu0 %v1225
    %v1227 = vand.u32 %v74, 4294901760
    %1228 = vmatpush.msra.mxu0 %v1227
    %v1229 = vand.u32 %v71, 4294901760
    %1230 = vmatpush.msra.mxu0 %v1229
    %v1231 = vand.u32 %v68, 4294901760
    %1232 = vmatpush.msra.mxu0 %v1231
    %v1233 = vand.u32 %v65, 4294901760
    %1234 = vmatpush.msra.mxu0 %v1233
    %v1235 = vand.u32 %v62, 4294901760
    %1236 = vmatpush.msra.mxu0 %v1235
    %v1237 = vand.u32 %v59, 4294901760
    %1238 = vmatpush.msra.mxu0 %v1237
    %v1239 = vand.u32 %v56, 4294901760
    %1240 = vmatpush.msra.mxu0 %v1239
    %v1241 = vand.u32 %v53, 4294901760
    %1242 = vmatpush.msra.mxu0 %v1241
    %v1243 = vand.u32 %v50, 4294901760
    %1244 = vmatpush.msra.mxu0 %v1243
    %v1245 = vand.u32 %v47, 4294901760
    %1246 = vmatpush.msra.mxu0 %v1245
    %v1247 = vand.u32 %v44, 4294901760
    %1248 = vmatpush.msra.mxu0 %v1247
    %v1249 = vand.u32 %v188, 4294901760
    %v1250 = vsub.f32 %v188, %v1249
    %v1251 = vand.u32 %v1250, 4294901760
    %v1252 = vsub.f32 %v1250, %v1251
    %v1253 = vand.u32 %v1252, 4294901760
    %1254 = vmatmul.f32.gmra.mxu0 %v1253
    %v1255 = vpop.f32.mrf.mxu0
    %v1256 = vadd.f32 0.0, %v1255
    %1257 = vdwg.mxu0
    %v1258 = vand.u32 %v89, 4294901760
    %v1259 = vsub.f32 %v89, %v1258
    %v1260 = vand.u32 %v1259, 4294901760
    %v1261 = vsub.f32 %v1259, %v1260
    %v1262 = vand.u32 %v1261, 4294901760
    %1263 = vmatpush.msra.mxu0 %v1262
    %v1264 = vand.u32 %v86, 4294901760
    %v1265 = vsub.f32 %v86, %v1264
    %v1266 = vand.u32 %v1265, 4294901760
    %v1267 = vsub.f32 %v1265, %v1266
    %v1268 = vand.u32 %v1267, 4294901760
    %1269 = vmatpush.msra.mxu0 %v1268
    %v1270 = vand.u32 %v83, 4294901760
    %v1271 = vsub.f32 %v83, %v1270
    %v1272 = vand.u32 %v1271, 4294901760
    %v1273 = vsub.f32 %v1271, %v1272
    %v1274 = vand.u32 %v1273, 4294901760
    %1275 = vmatpush.msra.mxu0 %v1274
    %v1276 = vand.u32 %v80, 4294901760
    %v1277 = vsub.f32 %v80, %v1276
    %v1278 = vand.u32 %v1277, 4294901760
    %v1279 = vsub.f32 %v1277, %v1278
    %v1280 = vand.u32 %v1279, 4294901760
    %1281 = vmatpush.msra.mxu0 %v1280
    %v1282 = vand.u32 %v77, 4294901760
    %v1283 = vsub.f32 %v77, %v1282
    %v1284 = vand.u32 %v1283, 4294901760
    %v1285 = vsub.f32 %v1283, %v1284
    %v1286 = vand.u32 %v1285, 4294901760
    %1287 = vmatpush.msra.mxu0 %v1286
    %v1288 = vand.u32 %v74, 4294901760
    %v1289 = vsub.f32 %v74, %v1288
    %v1290 = vand.u32 %v1289, 4294901760
    %v1291 = vsub.f32 %v1289, %v1290
    %v1292 = vand.u32 %v1291, 4294901760
    %1293 = vmatpush.msra.mxu0 %v1292
    %v1294 = vand.u32 %v71, 4294901760
    %v1295 = vsub.f32 %v71, %v1294
    %v1296 = vand.u32 %v1295, 4294901760
    %v1297 = vsub.f32 %v1295, %v1296
    %v1298 = vand.u32 %v1297, 4294901760
    %1299 = vmatpush.msra.mxu0 %v1298
    %v1300 = vand.u32 %v68, 4294901760
    %v1301 = vsub.f32 %v68, %v1300
    %v1302 = vand.u32 %v1301, 4294901760
    %v1303 = vsub.f32 %v1301, %v1302
    %v1304 = vand.u32 %v1303, 4294901760
    %1305 = vmatpush.msra.mxu0 %v1304
    %v1306 = vand.u32 %v65, 4294901760
    %v1307 = vsub.f32 %v65, %v1306
    %v1308 = vand.u32 %v1307, 4294901760
    %v1309 = vsub.f32 %v1307, %v1308
    %v1310 = vand.u32 %v1309, 4294901760
    %1311 = vmatpush.msra.mxu0 %v1310
    %v1312 = vand.u32 %v62, 4294901760
    %v1313 = vsub.f32 %v62, %v1312
    %v1314 = vand.u32 %v1313, 4294901760
    %v1315 = vsub.f32 %v1313, %v1314
    %v1316 = vand.u32 %v1315, 4294901760
    %1317 = vmatpush.msra.mxu0 %v1316
    %v1318 = vand.u32 %v59, 4294901760
    %v1319 = vsub.f32 %v59, %v1318
    %v1320 = vand.u32 %v1319, 4294901760
    %v1321 = vsub.f32 %v1319, %v1320
    %v1322 = vand.u32 %v1321, 4294901760
    %1323 = vmatpush.msra.mxu0 %v1322
    %v1324 = vand.u32 %v56, 4294901760
    %v1325 = vsub.f32 %v56, %v1324
    %v1326 = vand.u32 %v1325, 4294901760
    %v1327 = vsub.f32 %v1325, %v1326
    %v1328 = vand.u32 %v1327, 4294901760
    %1329 = vmatpush.msra.mxu0 %v1328
    %v1330 = vand.u32 %v53, 4294901760
    %v1331 = vsub.f32 %v53, %v1330
    %v1332 = vand.u32 %v1331, 4294901760
    %v1333 = vsub.f32 %v1331, %v1332
    %v1334 = vand.u32 %v1333, 4294901760
    %1335 = vmatpush.msra.mxu0 %v1334
    %v1336 = vand.u32 %v50, 4294901760
    %v1337 = vsub.f32 %v50, %v1336
    %v1338 = vand.u32 %v1337, 4294901760
    %v1339 = vsub.f32 %v1337, %v1338
    %v1340 = vand.u32 %v1339, 4294901760
    %1341 = vmatpush.msra.mxu0 %v1340
    %v1342 = vand.u32 %v47, 4294901760
    %v1343 = vsub.f32 %v47, %v1342
    %v1344 = vand.u32 %v1343, 4294901760
    %v1345 = vsub.f32 %v1343, %v1344
    %v1346 = vand.u32 %v1345, 4294901760
    %1347 = vmatpush.msra.mxu0 %v1346
    %v1348 = vand.u32 %v44, 4294901760
    %v1349 = vsub.f32 %v44, %v1348
    %v1350 = vand.u32 %v1349, 4294901760
    %v1351 = vsub.f32 %v1349, %v1350
    %v1352 = vand.u32 %v1351, 4294901760
    %1353 = vmatpush.msra.mxu0 %v1352
    %v1354 = vand.u32 %v188, 4294901760
    %1355 = vmatmul.f32.gmra.mxu0 %v1354
    %v1356 = vpop.f32.mrf.mxu0
    %v1357 = vadd.f32 %v1256, %v1356
    %1358 = vdwg.mxu0
    %v1359 = vand.u32 %v89, 4294901760
    %v1360 = vsub.f32 %v89, %v1359
    %1361 = vmatpush.msra.mxu0 %v1360
    %v1362 = vand.u32 %v86, 4294901760
    %v1363 = vsub.f32 %v86, %v1362
    %1364 = vmatpush.msra.mxu0 %v1363
    %v1365 = vand.u32 %v83, 4294901760
    %v1366 = vsub.f32 %v83, %v1365
    %1367 = vmatpush.msra.mxu0 %v1366
    %v1368 = vand.u32 %v80, 4294901760
    %v1369 = vsub.f32 %v80, %v1368
    %1370 = vmatpush.msra.mxu0 %v1369
    %v1371 = vand.u32 %v77, 4294901760
    %v1372 = vsub.f32 %v77, %v1371
    %1373 = vmatpush.msra.mxu0 %v1372
    %v1374 = vand.u32 %v74, 4294901760
    %v1375 = vsub.f32 %v74, %v1374
    %1376 = vmatpush.msra.mxu0 %v1375
    %v1377 = vand.u32 %v71, 4294901760
    %v1378 = vsub.f32 %v71, %v1377
    %1379 = vmatpush.msra.mxu0 %v1378
    %v1380 = vand.u32 %v68, 4294901760
    %v1381 = vsub.f32 %v68, %v1380
    %1382 = vmatpush.msra.mxu0 %v1381
    %v1383 = vand.u32 %v65, 4294901760
    %v1384 = vsub.f32 %v65, %v1383
    %1385 = vmatpush.msra.mxu0 %v1384
    %v1386 = vand.u32 %v62, 4294901760
    %v1387 = vsub.f32 %v62, %v1386
    %1388 = vmatpush.msra.mxu0 %v1387
    %v1389 = vand.u32 %v59, 4294901760
    %v1390 = vsub.f32 %v59, %v1389
    %1391 = vmatpush.msra.mxu0 %v1390
    %v1392 = vand.u32 %v56, 4294901760
    %v1393 = vsub.f32 %v56, %v1392
    %1394 = vmatpush.msra.mxu0 %v1393
    %v1395 = vand.u32 %v53, 4294901760
    %v1396 = vsub.f32 %v53, %v1395
    %1397 = vmatpush.msra.mxu0 %v1396
    %v1398 = vand.u32 %v50, 4294901760
    %v1399 = vsub.f32 %v50, %v1398
    %1400 = vmatpush.msra.mxu0 %v1399
    %v1401 = vand.u32 %v47, 4294901760
    %v1402 = vsub.f32 %v47, %v1401
    %1403 = vmatpush.msra.mxu0 %v1402
    %v1404 = vand.u32 %v44, 4294901760
    %v1405 = vsub.f32 %v44, %v1404
    %1406 = vmatpush.msra.mxu0 %v1405
    %v1407 = vand.u32 %v188, 4294901760
    %v1408 = vsub.f32 %v188, %v1407
    %1409 = vmatmul.f32.gmra.mxu0 %v1408
    %v1410 = vpop.f32.mrf.mxu0
    %v1411 = vadd.f32 %v1357, %v1410
    %1412 = vdwg.mxu0
    %v1413 = vand.u32 %v89, 4294901760
    %1414 = vmatpush.msra.mxu0 %v1413
    %v1415 = vand.u32 %v86, 4294901760
    %1416 = vmatpush.msra.mxu0 %v1415
    %v1417 = vand.u32 %v83, 4294901760
    %1418 = vmatpush.msra.mxu0 %v1417
    %v1419 = vand.u32 %v80, 4294901760
    %1420 = vmatpush.msra.mxu0 %v1419
    %v1421 = vand.u32 %v77, 4294901760
    %1422 = vmatpush.msra.mxu0 %v1421
    %v1423 = vand.u32 %v74, 4294901760
    %1424 = vmatpush.msra.mxu0 %v1423
    %v1425 = vand.u32 %v71, 4294901760
    %1426 = vmatpush.msra.mxu0 %v1425
    %v1427 = vand.u32 %v68, 4294901760
    %1428 = vmatpush.msra.mxu0 %v1427
    %v1429 = vand.u32 %v65, 4294901760
    %1430 = vmatpush.msra.mxu0 %v1429
    %v1431 = vand.u32 %v62, 4294901760
    %1432 = vmatpush.msra.mxu0 %v1431
    %v1433 = vand.u32 %v59, 4294901760
    %1434 = vmatpush.msra.mxu0 %v1433
    %v1435 = vand.u32 %v56, 4294901760
    %1436 = vmatpush.msra.mxu0 %v1435
    %v1437 = vand.u32 %v53, 4294901760
    %1438 = vmatpush.msra.mxu0 %v1437
    %v1439 = vand.u32 %v50, 4294901760
    %1440 = vmatpush.msra.mxu0 %v1439
    %v1441 = vand.u32 %v47, 4294901760
    %1442 = vmatpush.msra.mxu0 %v1441
    %v1443 = vand.u32 %v44, 4294901760
    %1444 = vmatpush.msra.mxu0 %v1443
    %v1445 = vand.u32 %v188, 4294901760
    %v1446 = vsub.f32 %v188, %v1445
    %v1447 = vand.u32 %v1446, 4294901760
    %1448 = vmatmul.f32.gmra.mxu0 %v1447
    %v1449 = vpop.f32.mrf.mxu0
    %v1450 = vadd.f32 %v1411, %v1449
    %1451 = vdwg.mxu0
    %v1452 = vand.u32 %v89, 4294901760
    %v1453 = vsub.f32 %v89, %v1452
    %v1454 = vand.u32 %v1453, 4294901760
    %1455 = vmatpush.msra.mxu0 %v1454
    %v1456 = vand.u32 %v86, 4294901760
    %v1457 = vsub.f32 %v86, %v1456
    %v1458 = vand.u32 %v1457, 4294901760
    %1459 = vmatpush.msra.mxu0 %v1458
    %v1460 = vand.u32 %v83, 4294901760
    %v1461 = vsub.f32 %v83, %v1460
    %v1462 = vand.u32 %v1461, 4294901760
    %1463 = vmatpush.msra.mxu0 %v1462
    %v1464 = vand.u32 %v80, 4294901760
    %v1465 = vsub.f32 %v80, %v1464
    %v1466 = vand.u32 %v1465, 4294901760
    %1467 = vmatpush.msra.mxu0 %v1466
    %v1468 = vand.u32 %v77, 4294901760
    %v1469 = vsub.f32 %v77, %v1468
    %v1470 = vand.u32 %v1469, 4294901760
    %1471 = vmatpush.msra.mxu0 %v1470
    %v1472 = vand.u32 %v74, 4294901760
    %v1473 = vsub.f32 %v74, %v1472
    %v1474 = vand.u32 %v1473, 4294901760
    %1475 = vmatpush.msra.mxu0 %v1474
    %v1476 = vand.u32 %v71, 4294901760
    %v1477 = vsub.f32 %v71, %v1476
    %v1478 = vand.u32 %v1477, 4294901760
    %1479 = vmatpush.msra.mxu0 %v1478
    %v1480 = vand.u32 %v68, 4294901760
    %v1481 = vsub.f32 %v68, %v1480
    %v1482 = vand.u32 %v1481, 4294901760
    %1483 = vmatpush.msra.mxu0 %v1482
    %v1484 = vand.u32 %v65, 4294901760
    %v1485 = vsub.f32 %v65, %v1484
    %v1486 = vand.u32 %v1485, 4294901760
    %1487 = vmatpush.msra.mxu0 %v1486
    %v1488 = vand.u32 %v62, 4294901760
    %v1489 = vsub.f32 %v62, %v1488
    %v1490 = vand.u32 %v1489, 4294901760
    %1491 = vmatpush.msra.mxu0 %v1490
    %v1492 = vand.u32 %v59, 4294901760
    %v1493 = vsub.f32 %v59, %v1492
    %v1494 = vand.u32 %v1493, 4294901760
    %1495 = vmatpush.msra.mxu0 %v1494
    %v1496 = vand.u32 %v56, 4294901760
    %v1497 = vsub.f32 %v56, %v1496
    %v1498 = vand.u32 %v1497, 4294901760
    %1499 = vmatpush.msra.mxu0 %v1498
    %v1500 = vand.u32 %v53, 4294901760
    %v1501 = vsub.f32 %v53, %v1500
    %v1502 = vand.u32 %v1501, 4294901760
    %1503 = vmatpush.msra.mxu0 %v1502
    %v1504 = vand.u32 %v50, 4294901760
    %v1505 = vsub.f32 %v50, %v1504
    %v1506 = vand.u32 %v1505, 4294901760
    %1507 = vmatpush.msra.mxu0 %v1506
    %v1508 = vand.u32 %v47, 4294901760
    %v1509 = vsub.f32 %v47, %v1508
    %v1510 = vand.u32 %v1509, 4294901760
    %1511 = vmatpush.msra.mxu0 %v1510
    %v1512 = vand.u32 %v44, 4294901760
    %v1513 = vsub.f32 %v44, %v1512
    %v1514 = vand.u32 %v1513, 4294901760
    %1515 = vmatpush.msra.mxu0 %v1514
    %v1516 = vand.u32 %v188, 4294901760
    %1517 = vmatmul.f32.gmra.mxu0 %v1516
    %v1518 = vpop.f32.mrf.mxu0
    %v1519 = vadd.f32 %v1450, %v1518
    %1520 = vdwg.mxu0
    %v1521 = vand.u32 %v89, 4294901760
    %1522 = vmatpush.msra.mxu0 %v1521
    %v1523 = vand.u32 %v86, 4294901760
    %1524 = vmatpush.msra.mxu0 %v1523
    %v1525 = vand.u32 %v83, 4294901760
    %1526 = vmatpush.msra.mxu0 %v1525
    %v1527 = vand.u32 %v80, 4294901760
    %1528 = vmatpush.msra.mxu0 %v1527
    %v1529 = vand.u32 %v77, 4294901760
    %1530 = vmatpush.msra.mxu0 %v1529
    %v1531 = vand.u32 %v74, 4294901760
    %1532 = vmatpush.msra.mxu0 %v1531
    %v1533 = vand.u32 %v71, 4294901760
    %1534 = vmatpush.msra.mxu0 %v1533
    %v1535 = vand.u32 %v68, 4294901760
    %1536 = vmatpush.msra.mxu0 %v1535
    %v1537 = vand.u32 %v65, 4294901760
    %1538 = vmatpush.msra.mxu0 %v1537
    %v1539 = vand.u32 %v62, 4294901760
    %1540 = vmatpush.msra.mxu0 %v1539
    %v1541 = vand.u32 %v59, 4294901760
    %1542 = vmatpush.msra.mxu0 %v1541
    %v1543 = vand.u32 %v56, 4294901760
    %1544 = vmatpush.msra.mxu0 %v1543
    %v1545 = vand.u32 %v53, 4294901760
    %1546 = vmatpush.msra.mxu0 %v1545
    %v1547 = vand.u32 %v50, 4294901760
    %1548 = vmatpush.msra.mxu0 %v1547
    %v1549 = vand.u32 %v47, 4294901760
    %1550 = vmatpush.msra.mxu0 %v1549
    %v1551 = vand.u32 %v44, 4294901760
    %1552 = vmatpush.msra.mxu0 %v1551
    %v1553 = vand.u32 %v188, 4294901760
    %1554 = vmatmul.f32.gmra.mxu0 %v1553
    %v1555 = vpop.f32.mrf.mxu0
    %v1556 = vadd.f32 %v1519, %v1555
    %1557 = vdwg.mxu0
    %v1558 = vand.u32 %v137, 4294901760
    %1559 = vmatpush.msra.mxu0 %v1558
    %v1560 = vand.u32 %v134, 4294901760
    %1561 = vmatpush.msra.mxu0 %v1560
    %v1562 = vand.u32 %v131, 4294901760
    %1563 = vmatpush.msra.mxu0 %v1562
    %v1564 = vand.u32 %v128, 4294901760
    %1565 = vmatpush.msra.mxu0 %v1564
    %v1566 = vand.u32 %v125, 4294901760
    %1567 = vmatpush.msra.mxu0 %v1566
    %v1568 = vand.u32 %v122, 4294901760
    %1569 = vmatpush.msra.mxu0 %v1568
    %v1570 = vand.u32 %v119, 4294901760
    %1571 = vmatpush.msra.mxu0 %v1570
    %v1572 = vand.u32 %v116, 4294901760
    %1573 = vmatpush.msra.mxu0 %v1572
    %v1574 = vand.u32 %v113, 4294901760
    %1575 = vmatpush.msra.mxu0 %v1574
    %v1576 = vand.u32 %v110, 4294901760
    %1577 = vmatpush.msra.mxu0 %v1576
    %v1578 = vand.u32 %v107, 4294901760
    %1579 = vmatpush.msra.mxu0 %v1578
    %v1580 = vand.u32 %v104, 4294901760
    %1581 = vmatpush.msra.mxu0 %v1580
    %v1582 = vand.u32 %v101, 4294901760
    %1583 = vmatpush.msra.mxu0 %v1582
    %v1584 = vand.u32 %v98, 4294901760
    %1585 = vmatpush.msra.mxu0 %v1584
    %v1586 = vand.u32 %v95, 4294901760
    %1587 = vmatpush.msra.mxu0 %v1586
    %v1588 = vand.u32 %v92, 4294901760
    %1589 = vmatpush.msra.mxu0 %v1588
    %v1590 = vand.u32 %v189, 4294901760
    %v1591 = vsub.f32 %v189, %v1590
    %v1592 = vand.u32 %v1591, 4294901760
    %v1593 = vsub.f32 %v1591, %v1592
    %v1594 = vand.u32 %v1593, 4294901760
    %1595 = vmatmul.f32.gmra.mxu0 %v1594
    %v1596 = vpop.f32.mrf.mxu0
    %v1597 = vadd.f32 %v1556, %v1596
    %1598 = vdwg.mxu0
    %v1599 = vand.u32 %v137, 4294901760
    %v1600 = vsub.f32 %v137, %v1599
    %v1601 = vand.u32 %v1600, 4294901760
    %v1602 = vsub.f32 %v1600, %v1601
    %v1603 = vand.u32 %v1602, 4294901760
    %1604 = vmatpush.msra.mxu0 %v1603
    %v1605 = vand.u32 %v134, 4294901760
    %v1606 = vsub.f32 %v134, %v1605
    %v1607 = vand.u32 %v1606, 4294901760
    %v1608 = vsub.f32 %v1606, %v1607
    %v1609 = vand.u32 %v1608, 4294901760
    %1610 = vmatpush.msra.mxu0 %v1609
    %v1611 = vand.u32 %v131, 4294901760
    %v1612 = vsub.f32 %v131, %v1611
    %v1613 = vand.u32 %v1612, 4294901760
    %v1614 = vsub.f32 %v1612, %v1613
    %v1615 = vand.u32 %v1614, 4294901760
    %1616 = vmatpush.msra.mxu0 %v1615
    %v1617 = vand.u32 %v128, 4294901760
    %v1618 = vsub.f32 %v128, %v1617
    %v1619 = vand.u32 %v1618, 4294901760
    %v1620 = vsub.f32 %v1618, %v1619
    %v1621 = vand.u32 %v1620, 4294901760
    %1622 = vmatpush.msra.mxu0 %v1621
    %v1623 = vand.u32 %v125, 4294901760
    %v1624 = vsub.f32 %v125, %v1623
    %v1625 = vand.u32 %v1624, 4294901760
    %v1626 = vsub.f32 %v1624, %v1625
    %v1627 = vand.u32 %v1626, 4294901760
    %1628 = vmatpush.msra.mxu0 %v1627
    %v1629 = vand.u32 %v122, 4294901760
    %v1630 = vsub.f32 %v122, %v1629
    %v1631 = vand.u32 %v1630, 4294901760
    %v1632 = vsub.f32 %v1630, %v1631
    %v1633 = vand.u32 %v1632, 4294901760
    %1634 = vmatpush.msra.mxu0 %v1633
    %v1635 = vand.u32 %v119, 4294901760
    %v1636 = vsub.f32 %v119, %v1635
    %v1637 = vand.u32 %v1636, 4294901760
    %v1638 = vsub.f32 %v1636, %v1637
    %v1639 = vand.u32 %v1638, 4294901760
    %1640 = vmatpush.msra.mxu0 %v1639
    %v1641 = vand.u32 %v116, 4294901760
    %v1642 = vsub.f32 %v116, %v1641
    %v1643 = vand.u32 %v1642, 4294901760
    %v1644 = vsub.f32 %v1642, %v1643
    %v1645 = vand.u32 %v1644, 4294901760
    %1646 = vmatpush.msra.mxu0 %v1645
    %v1647 = vand.u32 %v113, 4294901760
    %v1648 = vsub.f32 %v113, %v1647
    %v1649 = vand.u32 %v1648, 4294901760
    %v1650 = vsub.f32 %v1648, %v1649
    %v1651 = vand.u32 %v1650, 4294901760
    %1652 = vmatpush.msra.mxu0 %v1651
    %v1653 = vand.u32 %v110, 4294901760
    %v1654 = vsub.f32 %v110, %v1653
    %v1655 = vand.u32 %v1654, 4294901760
    %v1656 = vsub.f32 %v1654, %v1655
    %v1657 = vand.u32 %v1656, 4294901760
    %1658 = vmatpush.msra.mxu0 %v1657
    %v1659 = vand.u32 %v107, 4294901760
    %v1660 = vsub.f32 %v107, %v1659
    %v1661 = vand.u32 %v1660, 4294901760
    %v1662 = vsub.f32 %v1660, %v1661
    %v1663 = vand.u32 %v1662, 4294901760
    %1664 = vmatpush.msra.mxu0 %v1663
    %v1665 = vand.u32 %v104, 4294901760
    %v1666 = vsub.f32 %v104, %v1665
    %v1667 = vand.u32 %v1666, 4294901760
    %v1668 = vsub.f32 %v1666, %v1667
    %v1669 = vand.u32 %v1668, 4294901760
    %1670 = vmatpush.msra.mxu0 %v1669
    %v1671 = vand.u32 %v101, 4294901760
    %v1672 = vsub.f32 %v101, %v1671
    %v1673 = vand.u32 %v1672, 4294901760
    %v1674 = vsub.f32 %v1672, %v1673
    %v1675 = vand.u32 %v1674, 4294901760
    %1676 = vmatpush.msra.mxu0 %v1675
    %v1677 = vand.u32 %v98, 4294901760
    %v1678 = vsub.f32 %v98, %v1677
    %v1679 = vand.u32 %v1678, 4294901760
    %v1680 = vsub.f32 %v1678, %v1679
    %v1681 = vand.u32 %v1680, 4294901760
    %1682 = vmatpush.msra.mxu0 %v1681
    %v1683 = vand.u32 %v95, 4294901760
    %v1684 = vsub.f32 %v95, %v1683
    %v1685 = vand.u32 %v1684, 4294901760
    %v1686 = vsub.f32 %v1684, %v1685
    %v1687 = vand.u32 %v1686, 4294901760
    %1688 = vmatpush.msra.mxu0 %v1687
    %v1689 = vand.u32 %v92, 4294901760
    %v1690 = vsub.f32 %v92, %v1689
    %v1691 = vand.u32 %v1690, 4294901760
    %v1692 = vsub.f32 %v1690, %v1691
    %v1693 = vand.u32 %v1692, 4294901760
    %1694 = vmatpush.msra.mxu0 %v1693
    %v1695 = vand.u32 %v189, 4294901760
    %1696 = vmatmul.f32.gmra.mxu0 %v1695
    %v1697 = vpop.f32.mrf.mxu0
    %v1698 = vadd.f32 %v1597, %v1697
    %1699 = vdwg.mxu0
    %v1700 = vand.u32 %v137, 4294901760
    %v1701 = vsub.f32 %v137, %v1700
    %1702 = vmatpush.msra.mxu0 %v1701
    %v1703 = vand.u32 %v134, 4294901760
    %v1704 = vsub.f32 %v134, %v1703
    %1705 = vmatpush.msra.mxu0 %v1704
    %v1706 = vand.u32 %v131, 4294901760
    %v1707 = vsub.f32 %v131, %v1706
    %1708 = vmatpush.msra.mxu0 %v1707
    %v1709 = vand.u32 %v128, 4294901760
    %v1710 = vsub.f32 %v128, %v1709
    %1711 = vmatpush.msra.mxu0 %v1710
    %v1712 = vand.u32 %v125, 4294901760
    %v1713 = vsub.f32 %v125, %v1712
    %1714 = vmatpush.msra.mxu0 %v1713
    %v1715 = vand.u32 %v122, 4294901760
    %v1716 = vsub.f32 %v122, %v1715
    %1717 = vmatpush.msra.mxu0 %v1716
    %v1718 = vand.u32 %v119, 4294901760
    %v1719 = vsub.f32 %v119, %v1718
    %1720 = vmatpush.msra.mxu0 %v1719
    %v1721 = vand.u32 %v116, 4294901760
    %v1722 = vsub.f32 %v116, %v1721
    %1723 = vmatpush.msra.mxu0 %v1722
    %v1724 = vand.u32 %v113, 4294901760
    %v1725 = vsub.f32 %v113, %v1724
    %1726 = vmatpush.msra.mxu0 %v1725
    %v1727 = vand.u32 %v110, 4294901760
    %v1728 = vsub.f32 %v110, %v1727
    %1729 = vmatpush.msra.mxu0 %v1728
    %v1730 = vand.u32 %v107, 4294901760
    %v1731 = vsub.f32 %v107, %v1730
    %1732 = vmatpush.msra.mxu0 %v1731
    %v1733 = vand.u32 %v104, 4294901760
    %v1734 = vsub.f32 %v104, %v1733
    %1735 = vmatpush.msra.mxu0 %v1734
    %v1736 = vand.u32 %v101, 4294901760
    %v1737 = vsub.f32 %v101, %v1736
    %1738 = vmatpush.msra.mxu0 %v1737
    %v1739 = vand.u32 %v98, 4294901760
    %v1740 = vsub.f32 %v98, %v1739
    %1741 = vmatpush.msra.mxu0 %v1740
    %v1742 = vand.u32 %v95, 4294901760
    %v1743 = vsub.f32 %v95, %v1742
    %1744 = vmatpush.msra.mxu0 %v1743
    %v1745 = vand.u32 %v92, 4294901760
    %v1746 = vsub.f32 %v92, %v1745
    %1747 = vmatpush.msra.mxu0 %v1746
    %v1748 = vand.u32 %v189, 4294901760
    %v1749 = vsub.f32 %v189, %v1748
    %1750 = vmatmul.f32.gmra.mxu0 %v1749
    %v1751 = vpop.f32.mrf.mxu0
    %v1752 = vadd.f32 %v1698, %v1751
    %1753 = vdwg.mxu0
    %v1754 = vand.u32 %v137, 4294901760
    %1755 = vmatpush.msra.mxu0 %v1754
    %v1756 = vand.u32 %v134, 4294901760
    %1757 = vmatpush.msra.mxu0 %v1756
    %v1758 = vand.u32 %v131, 4294901760
    %1759 = vmatpush.msra.mxu0 %v1758
    %v1760 = vand.u32 %v128, 4294901760
    %1761 = vmatpush.msra.mxu0 %v1760
    %v1762 = vand.u32 %v125, 4294901760
    %1763 = vmatpush.msra.mxu0 %v1762
    %v1764 = vand.u32 %v122, 4294901760
    %1765 = vmatpush.msra.mxu0 %v1764
    %v1766 = vand.u32 %v119, 4294901760
    %1767 = vmatpush.msra.mxu0 %v1766
    %v1768 = vand.u32 %v116, 4294901760
    %1769 = vmatpush.msra.mxu0 %v1768
    %v1770 = vand.u32 %v113, 4294901760
    %1771 = vmatpush.msra.mxu0 %v1770
    %v1772 = vand.u32 %v110, 4294901760
    %1773 = vmatpush.msra.mxu0 %v1772
    %v1774 = vand.u32 %v107, 4294901760
    %1775 = vmatpush.msra.mxu0 %v1774
    %v1776 = vand.u32 %v104, 4294901760
    %1777 = vmatpush.msra.mxu0 %v1776
    %v1778 = vand.u32 %v101, 4294901760
    %1779 = vmatpush.msra.mxu0 %v1778
    %v1780 = vand.u32 %v98, 4294901760
    %1781 = vmatpush.msra.mxu0 %v1780
    %v1782 = vand.u32 %v95, 4294901760
    %1783 = vmatpush.msra.mxu0 %v1782
    %v1784 = vand.u32 %v92, 4294901760
    %1785 = vmatpush.msra.mxu0 %v1784
    %v1786 = vand.u32 %v189, 4294901760
    %v1787 = vsub.f32 %v189, %v1786
    %v1788 = vand.u32 %v1787, 4294901760
    %1789 = vmatmul.f32.gmra.mxu0 %v1788
    %v1790 = vpop.f32.mrf.mxu0
    %v1791 = vadd.f32 %v1752, %v1790
    %1792 = vdwg.mxu0
    %v1793 = vand.u32 %v137, 4294901760
    %v1794 = vsub.f32 %v137, %v1793
    %v1795 = vand.u32 %v1794, 4294901760
    %1796 = vmatpush.msra.mxu0 %v1795
    %v1797 = vand.u32 %v134, 4294901760
    %v1798 = vsub.f32 %v134, %v1797
    %v1799 = vand.u32 %v1798, 4294901760
    %1800 = vmatpush.msra.mxu0 %v1799
    %v1801 = vand.u32 %v131, 4294901760
    %v1802 = vsub.f32 %v131, %v1801
    %v1803 = vand.u32 %v1802, 4294901760
    %1804 = vmatpush.msra.mxu0 %v1803
    %v1805 = vand.u32 %v128, 4294901760
    %v1806 = vsub.f32 %v128, %v1805
    %v1807 = vand.u32 %v1806, 4294901760
    %1808 = vmatpush.msra.mxu0 %v1807
    %v1809 = vand.u32 %v125, 4294901760
    %v1810 = vsub.f32 %v125, %v1809
    %v1811 = vand.u32 %v1810, 4294901760
    %1812 = vmatpush.msra.mxu0 %v1811
    %v1813 = vand.u32 %v122, 4294901760
    %v1814 = vsub.f32 %v122, %v1813
    %v1815 = vand.u32 %v1814, 4294901760
    %1816 = vmatpush.msra.mxu0 %v1815
    %v1817 = vand.u32 %v119, 4294901760
    %v1818 = vsub.f32 %v119, %v1817
    %v1819 = vand.u32 %v1818, 4294901760
    %1820 = vmatpush.msra.mxu0 %v1819
    %v1821 = vand.u32 %v116, 4294901760
    %v1822 = vsub.f32 %v116, %v1821
    %v1823 = vand.u32 %v1822, 4294901760
    %1824 = vmatpush.msra.mxu0 %v1823
    %v1825 = vand.u32 %v113, 4294901760
    %v1826 = vsub.f32 %v113, %v1825
    %v1827 = vand.u32 %v1826, 4294901760
    %1828 = vmatpush.msra.mxu0 %v1827
    %v1829 = vand.u32 %v110, 4294901760
    %v1830 = vsub.f32 %v110, %v1829
    %v1831 = vand.u32 %v1830, 4294901760
    %1832 = vmatpush.msra.mxu0 %v1831
    %v1833 = vand.u32 %v107, 4294901760
    %v1834 = vsub.f32 %v107, %v1833
    %v1835 = vand.u32 %v1834, 4294901760
    %1836 = vmatpush.msra.mxu0 %v1835
    %v1837 = vand.u32 %v104, 4294901760
    %v1838 = vsub.f32 %v104, %v1837
    %v1839 = vand.u32 %v1838, 4294901760
    %1840 = vmatpush.msra.mxu0 %v1839
    %v1841 = vand.u32 %v101, 4294901760
    %v1842 = vsub.f32 %v101, %v1841
    %v1843 = vand.u32 %v1842, 4294901760
    %1844 = vmatpush.msra.mxu0 %v1843
    %v1845 = vand.u32 %v98, 4294901760
    %v1846 = vsub.f32 %v98, %v1845
    %v1847 = vand.u32 %v1846, 4294901760
    %1848 = vmatpush.msra.mxu0 %v1847
    %v1849 = vand.u32 %v95, 4294901760
    %v1850 = vsub.f32 %v95, %v1849
    %v1851 = vand.u32 %v1850, 4294901760
    %1852 = vmatpush.msra.mxu0 %v1851
    %v1853 = vand.u32 %v92, 4294901760
    %v1854 = vsub.f32 %v92, %v1853
    %v1855 = vand.u32 %v1854, 4294901760
    %1856 = vmatpush.msra.mxu0 %v1855
    %v1857 = vand.u32 %v189, 4294901760
    %1858 = vmatmul.f32.gmra.mxu0 %v1857
    %v1859 = vpop.f32.mrf.mxu0
    %v1860 = vadd.f32 %v1791, %v1859
    %1861 = vdwg.mxu0
    %v1862 = vand.u32 %v137, 4294901760
    %1863 = vmatpush.msra.mxu0 %v1862
    %v1864 = vand.u32 %v134, 4294901760
    %1865 = vmatpush.msra.mxu0 %v1864
    %v1866 = vand.u32 %v131, 4294901760
    %1867 = vmatpush.msra.mxu0 %v1866
    %v1868 = vand.u32 %v128, 4294901760
    %1869 = vmatpush.msra.mxu0 %v1868
    %v1870 = vand.u32 %v125, 4294901760
    %1871 = vmatpush.msra.mxu0 %v1870
    %v1872 = vand.u32 %v122, 4294901760
    %1873 = vmatpush.msra.mxu0 %v1872
    %v1874 = vand.u32 %v119, 4294901760
    %1875 = vmatpush.msra.mxu0 %v1874
    %v1876 = vand.u32 %v116, 4294901760
    %1877 = vmatpush.msra.mxu0 %v1876
    %v1878 = vand.u32 %v113, 4294901760
    %1879 = vmatpush.msra.mxu0 %v1878
    %v1880 = vand.u32 %v110, 4294901760
    %1881 = vmatpush.msra.mxu0 %v1880
    %v1882 = vand.u32 %v107, 4294901760
    %1883 = vmatpush.msra.mxu0 %v1882
    %v1884 = vand.u32 %v104, 4294901760
    %1885 = vmatpush.msra.mxu0 %v1884
    %v1886 = vand.u32 %v101, 4294901760
    %1887 = vmatpush.msra.mxu0 %v1886
    %v1888 = vand.u32 %v98, 4294901760
    %1889 = vmatpush.msra.mxu0 %v1888
    %v1890 = vand.u32 %v95, 4294901760
    %1891 = vmatpush.msra.mxu0 %v1890
    %v1892 = vand.u32 %v92, 4294901760
    %1893 = vmatpush.msra.mxu0 %v1892
    %v1894 = vand.u32 %v189, 4294901760
    %1895 = vmatmul.f32.gmra.mxu0 %v1894
    %v1896 = vpop.f32.mrf.mxu0
    %v1897 = vadd.f32 %v1860, %v1896
    %1898 = vdwg.mxu0
    %v1899 = vand.u32 %v185, 4294901760
    %1900 = vmatpush.msra.mxu0 %v1899
    %v1901 = vand.u32 %v182, 4294901760
    %1902 = vmatpush.msra.mxu0 %v1901
    %v1903 = vand.u32 %v179, 4294901760
    %1904 = vmatpush.msra.mxu0 %v1903
    %v1905 = vand.u32 %v176, 4294901760
    %1906 = vmatpush.msra.mxu0 %v1905
    %v1907 = vand.u32 %v173, 4294901760
    %1908 = vmatpush.msra.mxu0 %v1907
    %v1909 = vand.u32 %v170, 4294901760
    %1910 = vmatpush.msra.mxu0 %v1909
    %v1911 = vand.u32 %v167, 4294901760
    %1912 = vmatpush.msra.mxu0 %v1911
    %v1913 = vand.u32 %v164, 4294901760
    %1914 = vmatpush.msra.mxu0 %v1913
    %v1915 = vand.u32 %v161, 4294901760
    %1916 = vmatpush.msra.mxu0 %v1915
    %v1917 = vand.u32 %v158, 4294901760
    %1918 = vmatpush.msra.mxu0 %v1917
    %v1919 = vand.u32 %v155, 4294901760
    %1920 = vmatpush.msra.mxu0 %v1919
    %v1921 = vand.u32 %v152, 4294901760
    %1922 = vmatpush.msra.mxu0 %v1921
    %v1923 = vand.u32 %v149, 4294901760
    %1924 = vmatpush.msra.mxu0 %v1923
    %v1925 = vand.u32 %v146, 4294901760
    %1926 = vmatpush.msra.mxu0 %v1925
    %v1927 = vand.u32 %v143, 4294901760
    %1928 = vmatpush.msra.mxu0 %v1927
    %v1929 = vand.u32 %v140, 4294901760
    %1930 = vmatpush.msra.mxu0 %v1929
    %v1931 = vand.u32 %v190, 4294901760
    %v1932 = vsub.f32 %v190, %v1931
    %v1933 = vand.u32 %v1932, 4294901760
    %v1934 = vsub.f32 %v1932, %v1933
    %v1935 = vand.u32 %v1934, 4294901760
    %1936 = vmatmul.f32.gmra.mxu0 %v1935
    %v1937 = vpop.f32.mrf.mxu0
    %v1938 = vadd.f32 %v1897, %v1937
    %1939 = vdwg.mxu0
    %v1940 = vand.u32 %v185, 4294901760
    %v1941 = vsub.f32 %v185, %v1940
    %v1942 = vand.u32 %v1941, 4294901760
    %v1943 = vsub.f32 %v1941, %v1942
    %v1944 = vand.u32 %v1943, 4294901760
    %1945 = vmatpush.msra.mxu0 %v1944
    %v1946 = vand.u32 %v182, 4294901760
    %v1947 = vsub.f32 %v182, %v1946
    %v1948 = vand.u32 %v1947, 4294901760
    %v1949 = vsub.f32 %v1947, %v1948
    %v1950 = vand.u32 %v1949, 4294901760
    %1951 = vmatpush.msra.mxu0 %v1950
    %v1952 = vand.u32 %v179, 4294901760
    %v1953 = vsub.f32 %v179, %v1952
    %v1954 = vand.u32 %v1953, 4294901760
    %v1955 = vsub.f32 %v1953, %v1954
    %v1956 = vand.u32 %v1955, 4294901760
    %1957 = vmatpush.msra.mxu0 %v1956
    %v1958 = vand.u32 %v176, 4294901760
    %v1959 = vsub.f32 %v176, %v1958
    %v1960 = vand.u32 %v1959, 4294901760
    %v1961 = vsub.f32 %v1959, %v1960
    %v1962 = vand.u32 %v1961, 4294901760
    %1963 = vmatpush.msra.mxu0 %v1962
    %v1964 = vand.u32 %v173, 4294901760
    %v1965 = vsub.f32 %v173, %v1964
    %v1966 = vand.u32 %v1965, 4294901760
    %v1967 = vsub.f32 %v1965, %v1966
    %v1968 = vand.u32 %v1967, 4294901760
    %1969 = vmatpush.msra.mxu0 %v1968
    %v1970 = vand.u32 %v170, 4294901760
    %v1971 = vsub.f32 %v170, %v1970
    %v1972 = vand.u32 %v1971, 4294901760
    %v1973 = vsub.f32 %v1971, %v1972
    %v1974 = vand.u32 %v1973, 4294901760
    %1975 = vmatpush.msra.mxu0 %v1974
    %v1976 = vand.u32 %v167, 4294901760
    %v1977 = vsub.f32 %v167, %v1976
    %v1978 = vand.u32 %v1977, 4294901760
    %v1979 = vsub.f32 %v1977, %v1978
    %v1980 = vand.u32 %v1979, 4294901760
    %1981 = vmatpush.msra.mxu0 %v1980
    %v1982 = vand.u32 %v164, 4294901760
    %v1983 = vsub.f32 %v164, %v1982
    %v1984 = vand.u32 %v1983, 4294901760
    %v1985 = vsub.f32 %v1983, %v1984
    %v1986 = vand.u32 %v1985, 4294901760
    %1987 = vmatpush.msra.mxu0 %v1986
    %v1988 = vand.u32 %v161, 4294901760
    %v1989 = vsub.f32 %v161, %v1988
    %v1990 = vand.u32 %v1989, 4294901760
    %v1991 = vsub.f32 %v1989, %v1990
    %v1992 = vand.u32 %v1991, 4294901760
    %1993 = vmatpush.msra.mxu0 %v1992
    %v1994 = vand.u32 %v158, 4294901760
    %v1995 = vsub.f32 %v158, %v1994
    %v1996 = vand.u32 %v1995, 4294901760
    %v1997 = vsub.f32 %v1995, %v1996
    %v1998 = vand.u32 %v1997, 4294901760
    %1999 = vmatpush.msra.mxu0 %v1998
    %v2000 = vand.u32 %v155, 4294901760
    %v2001 = vsub.f32 %v155, %v2000
    %v2002 = vand.u32 %v2001, 4294901760
    %v2003 = vsub.f32 %v2001, %v2002
    %v2004 = vand.u32 %v2003, 4294901760
    %2005 = vmatpush.msra.mxu0 %v2004
    %v2006 = vand.u32 %v152, 4294901760
    %v2007 = vsub.f32 %v152, %v2006
    %v2008 = vand.u32 %v2007, 4294901760
    %v2009 = vsub.f32 %v2007, %v2008
    %v2010 = vand.u32 %v2009, 4294901760
    %2011 = vmatpush.msra.mxu0 %v2010
    %v2012 = vand.u32 %v149, 4294901760
    %v2013 = vsub.f32 %v149, %v2012
    %v2014 = vand.u32 %v2013, 4294901760
    %v2015 = vsub.f32 %v2013, %v2014
    %v2016 = vand.u32 %v2015, 4294901760
    %2017 = vmatpush.msra.mxu0 %v2016
    %v2018 = vand.u32 %v146, 4294901760
    %v2019 = vsub.f32 %v146, %v2018
    %v2020 = vand.u32 %v2019, 4294901760
    %v2021 = vsub.f32 %v2019, %v2020
    %v2022 = vand.u32 %v2021, 4294901760
    %2023 = vmatpush.msra.mxu0 %v2022
    %v2024 = vand.u32 %v143, 4294901760
    %v2025 = vsub.f32 %v143, %v2024
    %v2026 = vand.u32 %v2025, 4294901760
    %v2027 = vsub.f32 %v2025, %v2026
    %v2028 = vand.u32 %v2027, 4294901760
    %2029 = vmatpush.msra.mxu0 %v2028
    %v2030 = vand.u32 %v140, 4294901760
    %v2031 = vsub.f32 %v140, %v2030
    %v2032 = vand.u32 %v2031, 4294901760
    %v2033 = vsub.f32 %v2031, %v2032
    %v2034 = vand.u32 %v2033, 4294901760
    %2035 = vmatpush.msra.mxu0 %v2034
    %v2036 = vand.u32 %v190, 4294901760
    %2037 = vmatmul.f32.gmra.mxu0 %v2036
    %v2038 = vpop.f32.mrf.mxu0
    %v2039 = vadd.f32 %v1938, %v2038
    %2040 = vdwg.mxu0
    %v2041 = vand.u32 %v185, 4294901760
    %v2042 = vsub.f32 %v185, %v2041
    %2043 = vmatpush.msra.mxu0 %v2042
    %v2044 = vand.u32 %v182, 4294901760
    %v2045 = vsub.f32 %v182, %v2044
    %2046 = vmatpush.msra.mxu0 %v2045
    %v2047 = vand.u32 %v179, 4294901760
    %v2048 = vsub.f32 %v179, %v2047
    %2049 = vmatpush.msra.mxu0 %v2048
    %v2050 = vand.u32 %v176, 4294901760
    %v2051 = vsub.f32 %v176, %v2050
    %2052 = vmatpush.msra.mxu0 %v2051
    %v2053 = vand.u32 %v173, 4294901760
    %v2054 = vsub.f32 %v173, %v2053
    %2055 = vmatpush.msra.mxu0 %v2054
    %v2056 = vand.u32 %v170, 4294901760
    %v2057 = vsub.f32 %v170, %v2056
    %2058 = vmatpush.msra.mxu0 %v2057
    %v2059 = vand.u32 %v167, 4294901760
    %v2060 = vsub.f32 %v167, %v2059
    %2061 = vmatpush.msra.mxu0 %v2060
    %v2062 = vand.u32 %v164, 4294901760
    %v2063 = vsub.f32 %v164, %v2062
    %2064 = vmatpush.msra.mxu0 %v2063
    %v2065 = vand.u32 %v161, 4294901760
    %v2066 = vsub.f32 %v161, %v2065
    %2067 = vmatpush.msra.mxu0 %v2066
    %v2068 = vand.u32 %v158, 4294901760
    %v2069 = vsub.f32 %v158, %v2068
    %2070 = vmatpush.msra.mxu0 %v2069
    %v2071 = vand.u32 %v155, 4294901760
    %v2072 = vsub.f32 %v155, %v2071
    %2073 = vmatpush.msra.mxu0 %v2072
    %v2074 = vand.u32 %v152, 4294901760
    %v2075 = vsub.f32 %v152, %v2074
    %2076 = vmatpush.msra.mxu0 %v2075
    %v2077 = vand.u32 %v149, 4294901760
    %v2078 = vsub.f32 %v149, %v2077
    %2079 = vmatpush.msra.mxu0 %v2078
    %v2080 = vand.u32 %v146, 4294901760
    %v2081 = vsub.f32 %v146, %v2080
    %2082 = vmatpush.msra.mxu0 %v2081
    %v2083 = vand.u32 %v143, 4294901760
    %v2084 = vsub.f32 %v143, %v2083
    %2085 = vmatpush.msra.mxu0 %v2084
    %v2086 = vand.u32 %v140, 4294901760
    %v2087 = vsub.f32 %v140, %v2086
    %2088 = vmatpush.msra.mxu0 %v2087
    %v2089 = vand.u32 %v190, 4294901760
    %v2090 = vsub.f32 %v190, %v2089
    %2091 = vmatmul.f32.gmra.mxu0 %v2090
    %v2092 = vpop.f32.mrf.mxu0
    %v2093 = vadd.f32 %v2039, %v2092
    %2094 = vdwg.mxu0
    %v2095 = vand.u32 %v185, 4294901760
    %2096 = vmatpush.msra.mxu0 %v2095
    %v2097 = vand.u32 %v182, 4294901760
    %2098 = vmatpush.msra.mxu0 %v2097
    %v2099 = vand.u32 %v179, 4294901760
    %2100 = vmatpush.msra.mxu0 %v2099
    %v2101 = vand.u32 %v176, 4294901760
    %2102 = vmatpush.msra.mxu0 %v2101
    %v2103 = vand.u32 %v173, 4294901760
    %2104 = vmatpush.msra.mxu0 %v2103
    %v2105 = vand.u32 %v170, 4294901760
    %2106 = vmatpush.msra.mxu0 %v2105
    %v2107 = vand.u32 %v167, 4294901760
    %2108 = vmatpush.msra.mxu0 %v2107
    %v2109 = vand.u32 %v164, 4294901760
    %2110 = vmatpush.msra.mxu0 %v2109
    %v2111 = vand.u32 %v161, 4294901760
    %2112 = vmatpush.msra.mxu0 %v2111
    %v2113 = vand.u32 %v158, 4294901760
    %2114 = vmatpush.msra.mxu0 %v2113
    %v2115 = vand.u32 %v155, 4294901760
    %2116 = vmatpush.msra.mxu0 %v2115
    %v2117 = vand.u32 %v152, 4294901760
    %2118 = vmatpush.msra.mxu0 %v2117
    %v2119 = vand.u32 %v149, 4294901760
    %2120 = vmatpush.msra.mxu0 %v2119
    %v2121 = vand.u32 %v146, 4294901760
    %2122 = vmatpush.msra.mxu0 %v2121
    %v2123 = vand.u32 %v143, 4294901760
    %2124 = vmatpush.msra.mxu0 %v2123
    %v2125 = vand.u32 %v140, 4294901760
    %2126 = vmatpush.msra.mxu0 %v2125
    %v2127 = vand.u32 %v190, 4294901760
    %v2128 = vsub.f32 %v190, %v2127
    %v2129 = vand.u32 %v2128, 4294901760
    %2130 = vmatmul.f32.gmra.mxu0 %v2129
    %v2131 = vpop.f32.mrf.mxu0
    %v2132 = vadd.f32 %v2093, %v2131
    %2133 = vdwg.mxu0
    %v2134 = vand.u32 %v185, 4294901760
    %v2135 = vsub.f32 %v185, %v2134
    %v2136 = vand.u32 %v2135, 4294901760
    %2137 = vmatpush.msra.mxu0 %v2136
    %v2138 = vand.u32 %v182, 4294901760
    %v2139 = vsub.f32 %v182, %v2138
    %v2140 = vand.u32 %v2139, 4294901760
    %2141 = vmatpush.msra.mxu0 %v2140
    %v2142 = vand.u32 %v179, 4294901760
    %v2143 = vsub.f32 %v179, %v2142
    %v2144 = vand.u32 %v2143, 4294901760
    %2145 = vmatpush.msra.mxu0 %v2144
    %v2146 = vand.u32 %v176, 4294901760
    %v2147 = vsub.f32 %v176, %v2146
    %v2148 = vand.u32 %v2147, 4294901760
    %2149 = vmatpush.msra.mxu0 %v2148
    %v2150 = vand.u32 %v173, 4294901760
    %v2151 = vsub.f32 %v173, %v2150
    %v2152 = vand.u32 %v2151, 4294901760
    %2153 = vmatpush.msra.mxu0 %v2152
    %v2154 = vand.u32 %v170, 4294901760
    %v2155 = vsub.f32 %v170, %v2154
    %v2156 = vand.u32 %v2155, 4294901760
    %2157 = vmatpush.msra.mxu0 %v2156
    %v2158 = vand.u32 %v167, 4294901760
    %v2159 = vsub.f32 %v167, %v2158
    %v2160 = vand.u32 %v2159, 4294901760
    %2161 = vmatpush.msra.mxu0 %v2160
    %v2162 = vand.u32 %v164, 4294901760
    %v2163 = vsub.f32 %v164, %v2162
    %v2164 = vand.u32 %v2163, 4294901760
    %2165 = vmatpush.msra.mxu0 %v2164
    %v2166 = vand.u32 %v161, 4294901760
    %v2167 = vsub.f32 %v161, %v2166
    %v2168 = vand.u32 %v2167, 4294901760
    %2169 = vmatpush.msra.mxu0 %v2168
    %v2170 = vand.u32 %v158, 4294901760
    %v2171 = vsub.f32 %v158, %v2170
    %v2172 = vand.u32 %v2171, 4294901760
    %2173 = vmatpush.msra.mxu0 %v2172
    %v2174 = vand.u32 %v155, 4294901760
    %v2175 = vsub.f32 %v155, %v2174
    %v2176 = vand.u32 %v2175, 4294901760
    %2177 = vmatpush.msra.mxu0 %v2176
    %v2178 = vand.u32 %v152, 4294901760
    %v2179 = vsub.f32 %v152, %v2178
    %v2180 = vand.u32 %v2179, 4294901760
    %2181 = vmatpush.msra.mxu0 %v2180
    %v2182 = vand.u32 %v149, 4294901760
    %v2183 = vsub.f32 %v149, %v2182
    %v2184 = vand.u32 %v2183, 4294901760
    %2185 = vmatpush.msra.mxu0 %v2184
    %v2186 = vand.u32 %v146, 4294901760
    %v2187 = vsub.f32 %v146, %v2186
    %v2188 = vand.u32 %v2187, 4294901760
    %2189 = vmatpush.msra.mxu0 %v2188
    %v2190 = vand.u32 %v143, 4294901760
    %v2191 = vsub.f32 %v143, %v2190
    %v2192 = vand.u32 %v2191, 4294901760
    %2193 = vmatpush.msra.mxu0 %v2192
    %v2194 = vand.u32 %v140, 4294901760
    %v2195 = vsub.f32 %v140, %v2194
    %v2196 = vand.u32 %v2195, 4294901760
    %2197 = vmatpush.msra.mxu0 %v2196
    %v2198 = vand.u32 %v190, 4294901760
    %2199 = vmatmul.f32.gmra.mxu0 %v2198
    %v2200 = vpop.f32.mrf.mxu0
    %v2201 = vadd.f32 %v2132, %v2200
    %2202 = vdwg.mxu0
    %v2203 = vand.u32 %v185, 4294901760
    %2204 = vmatpush.msra.mxu0 %v2203
    %v2205 = vand.u32 %v182, 4294901760
    %2206 = vmatpush.msra.mxu0 %v2205
    %v2207 = vand.u32 %v179, 4294901760
    %2208 = vmatpush.msra.mxu0 %v2207
    %v2209 = vand.u32 %v176, 4294901760
    %2210 = vmatpush.msra.mxu0 %v2209
    %v2211 = vand.u32 %v173, 4294901760
    %2212 = vmatpush.msra.mxu0 %v2211
    %v2213 = vand.u32 %v170, 4294901760
    %2214 = vmatpush.msra.mxu0 %v2213
    %v2215 = vand.u32 %v167, 4294901760
    %2216 = vmatpush.msra.mxu0 %v2215
    %v2217 = vand.u32 %v164, 4294901760
    %2218 = vmatpush.msra.mxu0 %v2217
    %v2219 = vand.u32 %v161, 4294901760
    %2220 = vmatpush.msra.mxu0 %v2219
    %v2221 = vand.u32 %v158, 4294901760
    %2222 = vmatpush.msra.mxu0 %v2221
    %v2223 = vand.u32 %v155, 4294901760
    %2224 = vmatpush.msra.mxu0 %v2223
    %v2225 = vand.u32 %v152, 4294901760
    %2226 = vmatpush.msra.mxu0 %v2225
    %v2227 = vand.u32 %v149, 4294901760
    %2228 = vmatpush.msra.mxu0 %v2227
    %v2229 = vand.u32 %v146, 4294901760
    %2230 = vmatpush.msra.mxu0 %v2229
    %v2231 = vand.u32 %v143, 4294901760
    %2232 = vmatpush.msra.mxu0 %v2231
    %v2233 = vand.u32 %v140, 4294901760
    %2234 = vmatpush.msra.mxu0 %v2233
    %v2235 = vand.u32 %v190, 4294901760
    %2236 = vmatmul.f32.gmra.mxu0 %v2235
    %v2237 = vpop.f32.mrf.mxu0
    %v2238 = vadd.f32 %v2201, %v2237
    %2239 = vdwg.mxu0
    %v2240 = vand.u32 %v90, 4294901760
    %2241 = vmatpush.msra.mxu0 %v2240
    %v2242 = vand.u32 %v87, 4294901760
    %2243 = vmatpush.msra.mxu0 %v2242
    %v2244 = vand.u32 %v84, 4294901760
    %2245 = vmatpush.msra.mxu0 %v2244
    %v2246 = vand.u32 %v81, 4294901760
    %2247 = vmatpush.msra.mxu0 %v2246
    %v2248 = vand.u32 %v78, 4294901760
    %2249 = vmatpush.msra.mxu0 %v2248
    %v2250 = vand.u32 %v75, 4294901760
    %2251 = vmatpush.msra.mxu0 %v2250
    %v2252 = vand.u32 %v72, 4294901760
    %2253 = vmatpush.msra.mxu0 %v2252
    %v2254 = vand.u32 %v69, 4294901760
    %2255 = vmatpush.msra.mxu0 %v2254
    %v2256 = vand.u32 %v66, 4294901760
    %2257 = vmatpush.msra.mxu0 %v2256
    %v2258 = vand.u32 %v63, 4294901760
    %2259 = vmatpush.msra.mxu0 %v2258
    %v2260 = vand.u32 %v60, 4294901760
    %2261 = vmatpush.msra.mxu0 %v2260
    %v2262 = vand.u32 %v57, 4294901760
    %2263 = vmatpush.msra.mxu0 %v2262
    %v2264 = vand.u32 %v54, 4294901760
    %2265 = vmatpush.msra.mxu0 %v2264
    %v2266 = vand.u32 %v51, 4294901760
    %2267 = vmatpush.msra.mxu0 %v2266
    %v2268 = vand.u32 %v48, 4294901760
    %2269 = vmatpush.msra.mxu0 %v2268
    %v2270 = vand.u32 %v45, 4294901760
    %2271 = vmatpush.msra.mxu0 %v2270
    %v2272 = vand.u32 %v188, 4294901760
    %v2273 = vsub.f32 %v188, %v2272
    %v2274 = vand.u32 %v2273, 4294901760
    %v2275 = vsub.f32 %v2273, %v2274
    %v2276 = vand.u32 %v2275, 4294901760
    %2277 = vmatmul.f32.gmra.mxu0 %v2276
    %v2278 = vpop.f32.mrf.mxu0
    %v2279 = vadd.f32 0.0, %v2278
    %2280 = vdwg.mxu0
    %v2281 = vand.u32 %v90, 4294901760
    %v2282 = vsub.f32 %v90, %v2281
    %v2283 = vand.u32 %v2282, 4294901760
    %v2284 = vsub.f32 %v2282, %v2283
    %v2285 = vand.u32 %v2284, 4294901760
    %2286 = vmatpush.msra.mxu0 %v2285
    %v2287 = vand.u32 %v87, 4294901760
    %v2288 = vsub.f32 %v87, %v2287
    %v2289 = vand.u32 %v2288, 4294901760
    %v2290 = vsub.f32 %v2288, %v2289
    %v2291 = vand.u32 %v2290, 4294901760
    %2292 = vmatpush.msra.mxu0 %v2291
    %v2293 = vand.u32 %v84, 4294901760
    %v2294 = vsub.f32 %v84, %v2293
    %v2295 = vand.u32 %v2294, 4294901760
    %v2296 = vsub.f32 %v2294, %v2295
    %v2297 = vand.u32 %v2296, 4294901760
    %2298 = vmatpush.msra.mxu0 %v2297
    %v2299 = vand.u32 %v81, 4294901760
    %v2300 = vsub.f32 %v81, %v2299
    %v2301 = vand.u32 %v2300, 4294901760
    %v2302 = vsub.f32 %v2300, %v2301
    %v2303 = vand.u32 %v2302, 4294901760
    %2304 = vmatpush.msra.mxu0 %v2303
    %v2305 = vand.u32 %v78, 4294901760
    %v2306 = vsub.f32 %v78, %v2305
    %v2307 = vand.u32 %v2306, 4294901760
    %v2308 = vsub.f32 %v2306, %v2307
    %v2309 = vand.u32 %v2308, 4294901760
    %2310 = vmatpush.msra.mxu0 %v2309
    %v2311 = vand.u32 %v75, 4294901760
    %v2312 = vsub.f32 %v75, %v2311
    %v2313 = vand.u32 %v2312, 4294901760
    %v2314 = vsub.f32 %v2312, %v2313
    %v2315 = vand.u32 %v2314, 4294901760
    %2316 = vmatpush.msra.mxu0 %v2315
    %v2317 = vand.u32 %v72, 4294901760
    %v2318 = vsub.f32 %v72, %v2317
    %v2319 = vand.u32 %v2318, 4294901760
    %v2320 = vsub.f32 %v2318, %v2319
    %v2321 = vand.u32 %v2320, 4294901760
    %2322 = vmatpush.msra.mxu0 %v2321
    %v2323 = vand.u32 %v69, 4294901760
    %v2324 = vsub.f32 %v69, %v2323
    %v2325 = vand.u32 %v2324, 4294901760
    %v2326 = vsub.f32 %v2324, %v2325
    %v2327 = vand.u32 %v2326, 4294901760
    %2328 = vmatpush.msra.mxu0 %v2327
    %v2329 = vand.u32 %v66, 4294901760
    %v2330 = vsub.f32 %v66, %v2329
    %v2331 = vand.u32 %v2330, 4294901760
    %v2332 = vsub.f32 %v2330, %v2331
    %v2333 = vand.u32 %v2332, 4294901760
    %2334 = vmatpush.msra.mxu0 %v2333
    %v2335 = vand.u32 %v63, 4294901760
    %v2336 = vsub.f32 %v63, %v2335
    %v2337 = vand.u32 %v2336, 4294901760
    %v2338 = vsub.f32 %v2336, %v2337
    %v2339 = vand.u32 %v2338, 4294901760
    %2340 = vmatpush.msra.mxu0 %v2339
    %v2341 = vand.u32 %v60, 4294901760
    %v2342 = vsub.f32 %v60, %v2341
    %v2343 = vand.u32 %v2342, 4294901760
    %v2344 = vsub.f32 %v2342, %v2343
    %v2345 = vand.u32 %v2344, 4294901760
    %2346 = vmatpush.msra.mxu0 %v2345
    %v2347 = vand.u32 %v57, 4294901760
    %v2348 = vsub.f32 %v57, %v2347
    %v2349 = vand.u32 %v2348, 4294901760
    %v2350 = vsub.f32 %v2348, %v2349
    %v2351 = vand.u32 %v2350, 4294901760
    %2352 = vmatpush.msra.mxu0 %v2351
    %v2353 = vand.u32 %v54, 4294901760
    %v2354 = vsub.f32 %v54, %v2353
    %v2355 = vand.u32 %v2354, 4294901760
    %v2356 = vsub.f32 %v2354, %v2355
    %v2357 = vand.u32 %v2356, 4294901760
    %2358 = vmatpush.msra.mxu0 %v2357
    %v2359 = vand.u32 %v51, 4294901760
    %v2360 = vsub.f32 %v51, %v2359
    %v2361 = vand.u32 %v2360, 4294901760
    %v2362 = vsub.f32 %v2360, %v2361
    %v2363 = vand.u32 %v2362, 4294901760
    %2364 = vmatpush.msra.mxu0 %v2363
    %v2365 = vand.u32 %v48, 4294901760
    %v2366 = vsub.f32 %v48, %v2365
    %v2367 = vand.u32 %v2366, 4294901760
    %v2368 = vsub.f32 %v2366, %v2367
    %v2369 = vand.u32 %v2368, 4294901760
    %2370 = vmatpush.msra.mxu0 %v2369
    %v2371 = vand.u32 %v45, 4294901760
    %v2372 = vsub.f32 %v45, %v2371
    %v2373 = vand.u32 %v2372, 4294901760
    %v2374 = vsub.f32 %v2372, %v2373
    %v2375 = vand.u32 %v2374, 4294901760
    %2376 = vmatpush.msra.mxu0 %v2375
    %v2377 = vand.u32 %v188, 4294901760
    %2378 = vmatmul.f32.gmra.mxu0 %v2377
    %v2379 = vpop.f32.mrf.mxu0
    %v2380 = vadd.f32 %v2279, %v2379
    %2381 = vdwg.mxu0
    %v2382 = vand.u32 %v90, 4294901760
    %v2383 = vsub.f32 %v90, %v2382
    %2384 = vmatpush.msra.mxu0 %v2383
    %v2385 = vand.u32 %v87, 4294901760
    %v2386 = vsub.f32 %v87, %v2385
    %2387 = vmatpush.msra.mxu0 %v2386
    %v2388 = vand.u32 %v84, 4294901760
    %v2389 = vsub.f32 %v84, %v2388
    %2390 = vmatpush.msra.mxu0 %v2389
    %v2391 = vand.u32 %v81, 4294901760
    %v2392 = vsub.f32 %v81, %v2391
    %2393 = vmatpush.msra.mxu0 %v2392
    %v2394 = vand.u32 %v78, 4294901760
    %v2395 = vsub.f32 %v78, %v2394
    %2396 = vmatpush.msra.mxu0 %v2395
    %v2397 = vand.u32 %v75, 4294901760
    %v2398 = vsub.f32 %v75, %v2397
    %2399 = vmatpush.msra.mxu0 %v2398
    %v2400 = vand.u32 %v72, 4294901760
    %v2401 = vsub.f32 %v72, %v2400
    %2402 = vmatpush.msra.mxu0 %v2401
    %v2403 = vand.u32 %v69, 4294901760
    %v2404 = vsub.f32 %v69, %v2403
    %2405 = vmatpush.msra.mxu0 %v2404
    %v2406 = vand.u32 %v66, 4294901760
    %v2407 = vsub.f32 %v66, %v2406
    %2408 = vmatpush.msra.mxu0 %v2407
    %v2409 = vand.u32 %v63, 4294901760
    %v2410 = vsub.f32 %v63, %v2409
    %2411 = vmatpush.msra.mxu0 %v2410
    %v2412 = vand.u32 %v60, 4294901760
    %v2413 = vsub.f32 %v60, %v2412
    %2414 = vmatpush.msra.mxu0 %v2413
    %v2415 = vand.u32 %v57, 4294901760
    %v2416 = vsub.f32 %v57, %v2415
    %2417 = vmatpush.msra.mxu0 %v2416
    %v2418 = vand.u32 %v54, 4294901760
    %v2419 = vsub.f32 %v54, %v2418
    %2420 = vmatpush.msra.mxu0 %v2419
    %v2421 = vand.u32 %v51, 4294901760
    %v2422 = vsub.f32 %v51, %v2421
    %2423 = vmatpush.msra.mxu0 %v2422
    %v2424 = vand.u32 %v48, 4294901760
    %v2425 = vsub.f32 %v48, %v2424
    %2426 = vmatpush.msra.mxu0 %v2425
    %v2427 = vand.u32 %v45, 4294901760
    %v2428 = vsub.f32 %v45, %v2427
    %2429 = vmatpush.msra.mxu0 %v2428
    %v2430 = vand.u32 %v188, 4294901760
    %v2431 = vsub.f32 %v188, %v2430
    %2432 = vmatmul.f32.gmra.mxu0 %v2431
    %v2433 = vpop.f32.mrf.mxu0
    %v2434 = vadd.f32 %v2380, %v2433
    %2435 = vdwg.mxu0
    %v2436 = vand.u32 %v90, 4294901760
    %2437 = vmatpush.msra.mxu0 %v2436
    %v2438 = vand.u32 %v87, 4294901760
    %2439 = vmatpush.msra.mxu0 %v2438
    %v2440 = vand.u32 %v84, 4294901760
    %2441 = vmatpush.msra.mxu0 %v2440
    %v2442 = vand.u32 %v81, 4294901760
    %2443 = vmatpush.msra.mxu0 %v2442
    %v2444 = vand.u32 %v78, 4294901760
    %2445 = vmatpush.msra.mxu0 %v2444
    %v2446 = vand.u32 %v75, 4294901760
    %2447 = vmatpush.msra.mxu0 %v2446
    %v2448 = vand.u32 %v72, 4294901760
    %2449 = vmatpush.msra.mxu0 %v2448
    %v2450 = vand.u32 %v69, 4294901760
    %2451 = vmatpush.msra.mxu0 %v2450
    %v2452 = vand.u32 %v66, 4294901760
    %2453 = vmatpush.msra.mxu0 %v2452
    %v2454 = vand.u32 %v63, 4294901760
    %2455 = vmatpush.msra.mxu0 %v2454
    %v2456 = vand.u32 %v60, 4294901760
    %2457 = vmatpush.msra.mxu0 %v2456
    %v2458 = vand.u32 %v57, 4294901760
    %2459 = vmatpush.msra.mxu0 %v2458
    %v2460 = vand.u32 %v54, 4294901760
    %2461 = vmatpush.msra.mxu0 %v2460
    %v2462 = vand.u32 %v51, 4294901760
    %2463 = vmatpush.msra.mxu0 %v2462
    %v2464 = vand.u32 %v48, 4294901760
    %2465 = vmatpush.msra.mxu0 %v2464
    %v2466 = vand.u32 %v45, 4294901760
    %2467 = vmatpush.msra.mxu0 %v2466
    %v2468 = vand.u32 %v188, 4294901760
    %v2469 = vsub.f32 %v188, %v2468
    %v2470 = vand.u32 %v2469, 4294901760
    %2471 = vmatmul.f32.gmra.mxu0 %v2470
    %v2472 = vpop.f32.mrf.mxu0
    %v2473 = vadd.f32 %v2434, %v2472
    %2474 = vdwg.mxu0
    %v2475 = vand.u32 %v90, 4294901760
    %v2476 = vsub.f32 %v90, %v2475
    %v2477 = vand.u32 %v2476, 4294901760
    %2478 = vmatpush.msra.mxu0 %v2477
    %v2479 = vand.u32 %v87, 4294901760
    %v2480 = vsub.f32 %v87, %v2479
    %v2481 = vand.u32 %v2480, 4294901760
    %2482 = vmatpush.msra.mxu0 %v2481
    %v2483 = vand.u32 %v84, 4294901760
    %v2484 = vsub.f32 %v84, %v2483
    %v2485 = vand.u32 %v2484, 4294901760
    %2486 = vmatpush.msra.mxu0 %v2485
    %v2487 = vand.u32 %v81, 4294901760
    %v2488 = vsub.f32 %v81, %v2487
    %v2489 = vand.u32 %v2488, 4294901760
    %2490 = vmatpush.msra.mxu0 %v2489
    %v2491 = vand.u32 %v78, 4294901760
    %v2492 = vsub.f32 %v78, %v2491
    %v2493 = vand.u32 %v2492, 4294901760
    %2494 = vmatpush.msra.mxu0 %v2493
    %v2495 = vand.u32 %v75, 4294901760
    %v2496 = vsub.f32 %v75, %v2495
    %v2497 = vand.u32 %v2496, 4294901760
    %2498 = vmatpush.msra.mxu0 %v2497
    %v2499 = vand.u32 %v72, 4294901760
    %v2500 = vsub.f32 %v72, %v2499
    %v2501 = vand.u32 %v2500, 4294901760
    %2502 = vmatpush.msra.mxu0 %v2501
    %v2503 = vand.u32 %v69, 4294901760
    %v2504 = vsub.f32 %v69, %v2503
    %v2505 = vand.u32 %v2504, 4294901760
    %2506 = vmatpush.msra.mxu0 %v2505
    %v2507 = vand.u32 %v66, 4294901760
    %v2508 = vsub.f32 %v66, %v2507
    %v2509 = vand.u32 %v2508, 4294901760
    %2510 = vmatpush.msra.mxu0 %v2509
    %v2511 = vand.u32 %v63, 4294901760
    %v2512 = vsub.f32 %v63, %v2511
    %v2513 = vand.u32 %v2512, 4294901760
    %2514 = vmatpush.msra.mxu0 %v2513
    %v2515 = vand.u32 %v60, 4294901760
    %v2516 = vsub.f32 %v60, %v2515
    %v2517 = vand.u32 %v2516, 4294901760
    %2518 = vmatpush.msra.mxu0 %v2517
    %v2519 = vand.u32 %v57, 4294901760
    %v2520 = vsub.f32 %v57, %v2519
    %v2521 = vand.u32 %v2520, 4294901760
    %2522 = vmatpush.msra.mxu0 %v2521
    %v2523 = vand.u32 %v54, 4294901760
    %v2524 = vsub.f32 %v54, %v2523
    %v2525 = vand.u32 %v2524, 4294901760
    %2526 = vmatpush.msra.mxu0 %v2525
    %v2527 = vand.u32 %v51, 4294901760
    %v2528 = vsub.f32 %v51, %v2527
    %v2529 = vand.u32 %v2528, 4294901760
    %2530 = vmatpush.msra.mxu0 %v2529
    %v2531 = vand.u32 %v48, 4294901760
    %v2532 = vsub.f32 %v48, %v2531
    %v2533 = vand.u32 %v2532, 4294901760
    %2534 = vmatpush.msra.mxu0 %v2533
    %v2535 = vand.u32 %v45, 4294901760
    %v2536 = vsub.f32 %v45, %v2535
    %v2537 = vand.u32 %v2536, 4294901760
    %2538 = vmatpush.msra.mxu0 %v2537
    %v2539 = vand.u32 %v188, 4294901760
    %2540 = vmatmul.f32.gmra.mxu0 %v2539
    %v2541 = vpop.f32.mrf.mxu0
    %v2542 = vadd.f32 %v2473, %v2541
    %2543 = vdwg.mxu0
    %v2544 = vand.u32 %v90, 4294901760
    %2545 = vmatpush.msra.mxu0 %v2544
    %v2546 = vand.u32 %v87, 4294901760
    %2547 = vmatpush.msra.mxu0 %v2546
    %v2548 = vand.u32 %v84, 4294901760
    %2549 = vmatpush.msra.mxu0 %v2548
    %v2550 = vand.u32 %v81, 4294901760
    %2551 = vmatpush.msra.mxu0 %v2550
    %v2552 = vand.u32 %v78, 4294901760
    %2553 = vmatpush.msra.mxu0 %v2552
    %v2554 = vand.u32 %v75, 4294901760
    %2555 = vmatpush.msra.mxu0 %v2554
    %v2556 = vand.u32 %v72, 4294901760
    %2557 = vmatpush.msra.mxu0 %v2556
    %v2558 = vand.u32 %v69, 4294901760
    %2559 = vmatpush.msra.mxu0 %v2558
    %v2560 = vand.u32 %v66, 4294901760
    %2561 = vmatpush.msra.mxu0 %v2560
    %v2562 = vand.u32 %v63, 4294901760
    %2563 = vmatpush.msra.mxu0 %v2562
    %v2564 = vand.u32 %v60, 4294901760
    %2565 = vmatpush.msra.mxu0 %v2564
    %v2566 = vand.u32 %v57, 4294901760
    %2567 = vmatpush.msra.mxu0 %v2566
    %v2568 = vand.u32 %v54, 4294901760
    %2569 = vmatpush.msra.mxu0 %v2568
    %v2570 = vand.u32 %v51, 4294901760
    %2571 = vmatpush.msra.mxu0 %v2570
    %v2572 = vand.u32 %v48, 4294901760
    %2573 = vmatpush.msra.mxu0 %v2572
    %v2574 = vand.u32 %v45, 4294901760
    %2575 = vmatpush.msra.mxu0 %v2574
    %v2576 = vand.u32 %v188, 4294901760
    %2577 = vmatmul.f32.gmra.mxu0 %v2576
    %v2578 = vpop.f32.mrf.mxu0
    %v2579 = vadd.f32 %v2542, %v2578
    %2580 = vdwg.mxu0
    %v2581 = vand.u32 %v138, 4294901760
    %2582 = vmatpush.msra.mxu0 %v2581
    %v2583 = vand.u32 %v135, 4294901760
    %2584 = vmatpush.msra.mxu0 %v2583
    %v2585 = vand.u32 %v132, 4294901760
    %2586 = vmatpush.msra.mxu0 %v2585
    %v2587 = vand.u32 %v129, 4294901760
    %2588 = vmatpush.msra.mxu0 %v2587
    %v2589 = vand.u32 %v126, 4294901760
    %2590 = vmatpush.msra.mxu0 %v2589
    %v2591 = vand.u32 %v123, 4294901760
    %2592 = vmatpush.msra.mxu0 %v2591
    %v2593 = vand.u32 %v120, 4294901760
    %2594 = vmatpush.msra.mxu0 %v2593
    %v2595 = vand.u32 %v117, 4294901760
    %2596 = vmatpush.msra.mxu0 %v2595
    %v2597 = vand.u32 %v114, 4294901760
    %2598 = vmatpush.msra.mxu0 %v2597
    %v2599 = vand.u32 %v111, 4294901760
    %2600 = vmatpush.msra.mxu0 %v2599
    %v2601 = vand.u32 %v108, 4294901760
    %2602 = vmatpush.msra.mxu0 %v2601
    %v2603 = vand.u32 %v105, 4294901760
    %2604 = vmatpush.msra.mxu0 %v2603
    %v2605 = vand.u32 %v102, 4294901760
    %2606 = vmatpush.msra.mxu0 %v2605
    %v2607 = vand.u32 %v99, 4294901760
    %2608 = vmatpush.msra.mxu0 %v2607
    %v2609 = vand.u32 %v96, 4294901760
    %2610 = vmatpush.msra.mxu0 %v2609
    %v2611 = vand.u32 %v93, 4294901760
    %2612 = vmatpush.msra.mxu0 %v2611
    %v2613 = vand.u32 %v189, 4294901760
    %v2614 = vsub.f32 %v189, %v2613
    %v2615 = vand.u32 %v2614, 4294901760
    %v2616 = vsub.f32 %v2614, %v2615
    %v2617 = vand.u32 %v2616, 4294901760
    %2618 = vmatmul.f32.gmra.mxu0 %v2617
    %v2619 = vpop.f32.mrf.mxu0
    %v2620 = vadd.f32 %v2579, %v2619
    %2621 = vdwg.mxu0
    %v2622 = vand.u32 %v138, 4294901760
    %v2623 = vsub.f32 %v138, %v2622
    %v2624 = vand.u32 %v2623, 4294901760
    %v2625 = vsub.f32 %v2623, %v2624
    %v2626 = vand.u32 %v2625, 4294901760
    %2627 = vmatpush.msra.mxu0 %v2626
    %v2628 = vand.u32 %v135, 4294901760
    %v2629 = vsub.f32 %v135, %v2628
    %v2630 = vand.u32 %v2629, 4294901760
    %v2631 = vsub.f32 %v2629, %v2630
    %v2632 = vand.u32 %v2631, 4294901760
    %2633 = vmatpush.msra.mxu0 %v2632
    %v2634 = vand.u32 %v132, 4294901760
    %v2635 = vsub.f32 %v132, %v2634
    %v2636 = vand.u32 %v2635, 4294901760
    %v2637 = vsub.f32 %v2635, %v2636
    %v2638 = vand.u32 %v2637, 4294901760
    %2639 = vmatpush.msra.mxu0 %v2638
    %v2640 = vand.u32 %v129, 4294901760
    %v2641 = vsub.f32 %v129, %v2640
    %v2642 = vand.u32 %v2641, 4294901760
    %v2643 = vsub.f32 %v2641, %v2642
    %v2644 = vand.u32 %v2643, 4294901760
    %2645 = vmatpush.msra.mxu0 %v2644
    %v2646 = vand.u32 %v126, 4294901760
    %v2647 = vsub.f32 %v126, %v2646
    %v2648 = vand.u32 %v2647, 4294901760
    %v2649 = vsub.f32 %v2647, %v2648
    %v2650 = vand.u32 %v2649, 4294901760
    %2651 = vmatpush.msra.mxu0 %v2650
    %v2652 = vand.u32 %v123, 4294901760
    %v2653 = vsub.f32 %v123, %v2652
    %v2654 = vand.u32 %v2653, 4294901760
    %v2655 = vsub.f32 %v2653, %v2654
    %v2656 = vand.u32 %v2655, 4294901760
    %2657 = vmatpush.msra.mxu0 %v2656
    %v2658 = vand.u32 %v120, 4294901760
    %v2659 = vsub.f32 %v120, %v2658
    %v2660 = vand.u32 %v2659, 4294901760
    %v2661 = vsub.f32 %v2659, %v2660
    %v2662 = vand.u32 %v2661, 4294901760
    %2663 = vmatpush.msra.mxu0 %v2662
    %v2664 = vand.u32 %v117, 4294901760
    %v2665 = vsub.f32 %v117, %v2664
    %v2666 = vand.u32 %v2665, 4294901760
    %v2667 = vsub.f32 %v2665, %v2666
    %v2668 = vand.u32 %v2667, 4294901760
    %2669 = vmatpush.msra.mxu0 %v2668
    %v2670 = vand.u32 %v114, 4294901760
    %v2671 = vsub.f32 %v114, %v2670
    %v2672 = vand.u32 %v2671, 4294901760
    %v2673 = vsub.f32 %v2671, %v2672
    %v2674 = vand.u32 %v2673, 4294901760
    %2675 = vmatpush.msra.mxu0 %v2674
    %v2676 = vand.u32 %v111, 4294901760
    %v2677 = vsub.f32 %v111, %v2676
    %v2678 = vand.u32 %v2677, 4294901760
    %v2679 = vsub.f32 %v2677, %v2678
    %v2680 = vand.u32 %v2679, 4294901760
    %2681 = vmatpush.msra.mxu0 %v2680
    %v2682 = vand.u32 %v108, 4294901760
    %v2683 = vsub.f32 %v108, %v2682
    %v2684 = vand.u32 %v2683, 4294901760
    %v2685 = vsub.f32 %v2683, %v2684
    %v2686 = vand.u32 %v2685, 4294901760
    %2687 = vmatpush.msra.mxu0 %v2686
    %v2688 = vand.u32 %v105, 4294901760
    %v2689 = vsub.f32 %v105, %v2688
    %v2690 = vand.u32 %v2689, 4294901760
    %v2691 = vsub.f32 %v2689, %v2690
    %v2692 = vand.u32 %v2691, 4294901760
    %2693 = vmatpush.msra.mxu0 %v2692
    %v2694 = vand.u32 %v102, 4294901760
    %v2695 = vsub.f32 %v102, %v2694
    %v2696 = vand.u32 %v2695, 4294901760
    %v2697 = vsub.f32 %v2695, %v2696
    %v2698 = vand.u32 %v2697, 4294901760
    %2699 = vmatpush.msra.mxu0 %v2698
    %v2700 = vand.u32 %v99, 4294901760
    %v2701 = vsub.f32 %v99, %v2700
    %v2702 = vand.u32 %v2701, 4294901760
    %v2703 = vsub.f32 %v2701, %v2702
    %v2704 = vand.u32 %v2703, 4294901760
    %2705 = vmatpush.msra.mxu0 %v2704
    %v2706 = vand.u32 %v96, 4294901760
    %v2707 = vsub.f32 %v96, %v2706
    %v2708 = vand.u32 %v2707, 4294901760
    %v2709 = vsub.f32 %v2707, %v2708
    %v2710 = vand.u32 %v2709, 4294901760
    %2711 = vmatpush.msra.mxu0 %v2710
    %v2712 = vand.u32 %v93, 4294901760
    %v2713 = vsub.f32 %v93, %v2712
    %v2714 = vand.u32 %v2713, 4294901760
    %v2715 = vsub.f32 %v2713, %v2714
    %v2716 = vand.u32 %v2715, 4294901760
    %2717 = vmatpush.msra.mxu0 %v2716
    %v2718 = vand.u32 %v189, 4294901760
    %2719 = vmatmul.f32.gmra.mxu0 %v2718
    %v2720 = vpop.f32.mrf.mxu0
    %v2721 = vadd.f32 %v2620, %v2720
    %2722 = vdwg.mxu0
    %v2723 = vand.u32 %v138, 4294901760
    %v2724 = vsub.f32 %v138, %v2723
    %2725 = vmatpush.msra.mxu0 %v2724
    %v2726 = vand.u32 %v135, 4294901760
    %v2727 = vsub.f32 %v135, %v2726
    %2728 = vmatpush.msra.mxu0 %v2727
    %v2729 = vand.u32 %v132, 4294901760
    %v2730 = vsub.f32 %v132, %v2729
    %2731 = vmatpush.msra.mxu0 %v2730
    %v2732 = vand.u32 %v129, 4294901760
    %v2733 = vsub.f32 %v129, %v2732
    %2734 = vmatpush.msra.mxu0 %v2733
    %v2735 = vand.u32 %v126, 4294901760
    %v2736 = vsub.f32 %v126, %v2735
    %2737 = vmatpush.msra.mxu0 %v2736
    %v2738 = vand.u32 %v123, 4294901760
    %v2739 = vsub.f32 %v123, %v2738
    %2740 = vmatpush.msra.mxu0 %v2739
    %v2741 = vand.u32 %v120, 4294901760
    %v2742 = vsub.f32 %v120, %v2741
    %2743 = vmatpush.msra.mxu0 %v2742
    %v2744 = vand.u32 %v117, 4294901760
    %v2745 = vsub.f32 %v117, %v2744
    %2746 = vmatpush.msra.mxu0 %v2745
    %v2747 = vand.u32 %v114, 4294901760
    %v2748 = vsub.f32 %v114, %v2747
    %2749 = vmatpush.msra.mxu0 %v2748
    %v2750 = vand.u32 %v111, 4294901760
    %v2751 = vsub.f32 %v111, %v2750
    %2752 = vmatpush.msra.mxu0 %v2751
    %v2753 = vand.u32 %v108, 4294901760
    %v2754 = vsub.f32 %v108, %v2753
    %2755 = vmatpush.msra.mxu0 %v2754
    %v2756 = vand.u32 %v105, 4294901760
    %v2757 = vsub.f32 %v105, %v2756
    %2758 = vmatpush.msra.mxu0 %v2757
    %v2759 = vand.u32 %v102, 4294901760
    %v2760 = vsub.f32 %v102, %v2759
    %2761 = vmatpush.msra.mxu0 %v2760
    %v2762 = vand.u32 %v99, 4294901760
    %v2763 = vsub.f32 %v99, %v2762
    %2764 = vmatpush.msra.mxu0 %v2763
    %v2765 = vand.u32 %v96, 4294901760
    %v2766 = vsub.f32 %v96, %v2765
    %2767 = vmatpush.msra.mxu0 %v2766
    %v2768 = vand.u32 %v93, 4294901760
    %v2769 = vsub.f32 %v93, %v2768
    %2770 = vmatpush.msra.mxu0 %v2769
    %v2771 = vand.u32 %v189, 4294901760
    %v2772 = vsub.f32 %v189, %v2771
    %2773 = vmatmul.f32.gmra.mxu0 %v2772
    %v2774 = vpop.f32.mrf.mxu0
    %v2775 = vadd.f32 %v2721, %v2774
    %2776 = vdwg.mxu0
    %v2777 = vand.u32 %v138, 4294901760
    %2778 = vmatpush.msra.mxu0 %v2777
    %v2779 = vand.u32 %v135, 4294901760
    %2780 = vmatpush.msra.mxu0 %v2779
    %v2781 = vand.u32 %v132, 4294901760
    %2782 = vmatpush.msra.mxu0 %v2781
    %v2783 = vand.u32 %v129, 4294901760
    %2784 = vmatpush.msra.mxu0 %v2783
    %v2785 = vand.u32 %v126, 4294901760
    %2786 = vmatpush.msra.mxu0 %v2785
    %v2787 = vand.u32 %v123, 4294901760
    %2788 = vmatpush.msra.mxu0 %v2787
    %v2789 = vand.u32 %v120, 4294901760
    %2790 = vmatpush.msra.mxu0 %v2789
    %v2791 = vand.u32 %v117, 4294901760
    %2792 = vmatpush.msra.mxu0 %v2791
    %v2793 = vand.u32 %v114, 4294901760
    %2794 = vmatpush.msra.mxu0 %v2793
    %v2795 = vand.u32 %v111, 4294901760
    %2796 = vmatpush.msra.mxu0 %v2795
    %v2797 = vand.u32 %v108, 4294901760
    %2798 = vmatpush.msra.mxu0 %v2797
    %v2799 = vand.u32 %v105, 4294901760
    %2800 = vmatpush.msra.mxu0 %v2799
    %v2801 = vand.u32 %v102, 4294901760
    %2802 = vmatpush.msra.mxu0 %v2801
    %v2803 = vand.u32 %v99, 4294901760
    %2804 = vmatpush.msra.mxu0 %v2803
    %v2805 = vand.u32 %v96, 4294901760
    %2806 = vmatpush.msra.mxu0 %v2805
    %v2807 = vand.u32 %v93, 4294901760
    %2808 = vmatpush.msra.mxu0 %v2807
    %v2809 = vand.u32 %v189, 4294901760
    %v2810 = vsub.f32 %v189, %v2809
    %v2811 = vand.u32 %v2810, 4294901760
    %2812 = vmatmul.f32.gmra.mxu0 %v2811
    %v2813 = vpop.f32.mrf.mxu0
    %v2814 = vadd.f32 %v2775, %v2813
    %2815 = vdwg.mxu0
    %v2816 = vand.u32 %v138, 4294901760
    %v2817 = vsub.f32 %v138, %v2816
    %v2818 = vand.u32 %v2817, 4294901760
    %2819 = vmatpush.msra.mxu0 %v2818
    %v2820 = vand.u32 %v135, 4294901760
    %v2821 = vsub.f32 %v135, %v2820
    %v2822 = vand.u32 %v2821, 4294901760
    %2823 = vmatpush.msra.mxu0 %v2822
    %v2824 = vand.u32 %v132, 4294901760
    %v2825 = vsub.f32 %v132, %v2824
    %v2826 = vand.u32 %v2825, 4294901760
    %2827 = vmatpush.msra.mxu0 %v2826
    %v2828 = vand.u32 %v129, 4294901760
    %v2829 = vsub.f32 %v129, %v2828
    %v2830 = vand.u32 %v2829, 4294901760
    %2831 = vmatpush.msra.mxu0 %v2830
    %v2832 = vand.u32 %v126, 4294901760
    %v2833 = vsub.f32 %v126, %v2832
    %v2834 = vand.u32 %v2833, 4294901760
    %2835 = vmatpush.msra.mxu0 %v2834
    %v2836 = vand.u32 %v123, 4294901760
    %v2837 = vsub.f32 %v123, %v2836
    %v2838 = vand.u32 %v2837, 4294901760
    %2839 = vmatpush.msra.mxu0 %v2838
    %v2840 = vand.u32 %v120, 4294901760
    %v2841 = vsub.f32 %v120, %v2840
    %v2842 = vand.u32 %v2841, 4294901760
    %2843 = vmatpush.msra.mxu0 %v2842
    %v2844 = vand.u32 %v117, 4294901760
    %v2845 = vsub.f32 %v117, %v2844
    %v2846 = vand.u32 %v2845, 4294901760
    %2847 = vmatpush.msra.mxu0 %v2846
    %v2848 = vand.u32 %v114, 4294901760
    %v2849 = vsub.f32 %v114, %v2848
    %v2850 = vand.u32 %v2849, 4294901760
    %2851 = vmatpush.msra.mxu0 %v2850
    %v2852 = vand.u32 %v111, 4294901760
    %v2853 = vsub.f32 %v111, %v2852
    %v2854 = vand.u32 %v2853, 4294901760
    %2855 = vmatpush.msra.mxu0 %v2854
    %v2856 = vand.u32 %v108, 4294901760
    %v2857 = vsub.f32 %v108, %v2856
    %v2858 = vand.u32 %v2857, 4294901760
    %2859 = vmatpush.msra.mxu0 %v2858
    %v2860 = vand.u32 %v105, 4294901760
    %v2861 = vsub.f32 %v105, %v2860
    %v2862 = vand.u32 %v2861, 4294901760
    %2863 = vmatpush.msra.mxu0 %v2862
    %v2864 = vand.u32 %v102, 4294901760
    %v2865 = vsub.f32 %v102, %v2864
    %v2866 = vand.u32 %v2865, 4294901760
    %2867 = vmatpush.msra.mxu0 %v2866
    %v2868 = vand.u32 %v99, 4294901760
    %v2869 = vsub.f32 %v99, %v2868
    %v2870 = vand.u32 %v2869, 4294901760
    %2871 = vmatpush.msra.mxu0 %v2870
    %v2872 = vand.u32 %v96, 4294901760
    %v2873 = vsub.f32 %v96, %v2872
    %v2874 = vand.u32 %v2873, 4294901760
    %2875 = vmatpush.msra.mxu0 %v2874
    %v2876 = vand.u32 %v93, 4294901760
    %v2877 = vsub.f32 %v93, %v2876
    %v2878 = vand.u32 %v2877, 4294901760
    %2879 = vmatpush.msra.mxu0 %v2878
    %v2880 = vand.u32 %v189, 4294901760
    %2881 = vmatmul.f32.gmra.mxu0 %v2880
    %v2882 = vpop.f32.mrf.mxu0
    %v2883 = vadd.f32 %v2814, %v2882
    %2884 = vdwg.mxu0
    %v2885 = vand.u32 %v138, 4294901760
    %2886 = vmatpush.msra.mxu0 %v2885
    %v2887 = vand.u32 %v135, 4294901760
    %2888 = vmatpush.msra.mxu0 %v2887
    %v2889 = vand.u32 %v132, 4294901760
    %2890 = vmatpush.msra.mxu0 %v2889
    %v2891 = vand.u32 %v129, 4294901760
    %2892 = vmatpush.msra.mxu0 %v2891
    %v2893 = vand.u32 %v126, 4294901760
    %2894 = vmatpush.msra.mxu0 %v2893
    %v2895 = vand.u32 %v123, 4294901760
    %2896 = vmatpush.msra.mxu0 %v2895
    %v2897 = vand.u32 %v120, 4294901760
    %2898 = vmatpush.msra.mxu0 %v2897
    %v2899 = vand.u32 %v117, 4294901760
    %2900 = vmatpush.msra.mxu0 %v2899
    %v2901 = vand.u32 %v114, 4294901760
    %2902 = vmatpush.msra.mxu0 %v2901
    %v2903 = vand.u32 %v111, 4294901760
    %2904 = vmatpush.msra.mxu0 %v2903
    %v2905 = vand.u32 %v108, 4294901760
    %2906 = vmatpush.msra.mxu0 %v2905
    %v2907 = vand.u32 %v105, 4294901760
    %2908 = vmatpush.msra.mxu0 %v2907
    %v2909 = vand.u32 %v102, 4294901760
    %2910 = vmatpush.msra.mxu0 %v2909
    %v2911 = vand.u32 %v99, 4294901760
    %2912 = vmatpush.msra.mxu0 %v2911
    %v2913 = vand.u32 %v96, 4294901760
    %2914 = vmatpush.msra.mxu0 %v2913
    %v2915 = vand.u32 %v93, 4294901760
    %2916 = vmatpush.msra.mxu0 %v2915
    %v2917 = vand.u32 %v189, 4294901760
    %2918 = vmatmul.f32.gmra.mxu0 %v2917
    %v2919 = vpop.f32.mrf.mxu0
    %v2920 = vadd.f32 %v2883, %v2919
    %2921 = vdwg.mxu0
    %v2922 = vand.u32 %v186, 4294901760
    %2923 = vmatpush.msra.mxu0 %v2922
    %v2924 = vand.u32 %v183, 4294901760
    %2925 = vmatpush.msra.mxu0 %v2924
    %v2926 = vand.u32 %v180, 4294901760
    %2927 = vmatpush.msra.mxu0 %v2926
    %v2928 = vand.u32 %v177, 4294901760
    %2929 = vmatpush.msra.mxu0 %v2928
    %v2930 = vand.u32 %v174, 4294901760
    %2931 = vmatpush.msra.mxu0 %v2930
    %v2932 = vand.u32 %v171, 4294901760
    %2933 = vmatpush.msra.mxu0 %v2932
    %v2934 = vand.u32 %v168, 4294901760
    %2935 = vmatpush.msra.mxu0 %v2934
    %v2936 = vand.u32 %v165, 4294901760
    %2937 = vmatpush.msra.mxu0 %v2936
    %v2938 = vand.u32 %v162, 4294901760
    %2939 = vmatpush.msra.mxu0 %v2938
    %v2940 = vand.u32 %v159, 4294901760
    %2941 = vmatpush.msra.mxu0 %v2940
    %v2942 = vand.u32 %v156, 4294901760
    %2943 = vmatpush.msra.mxu0 %v2942
    %v2944 = vand.u32 %v153, 4294901760
    %2945 = vmatpush.msra.mxu0 %v2944
    %v2946 = vand.u32 %v150, 4294901760
    %2947 = vmatpush.msra.mxu0 %v2946
    %v2948 = vand.u32 %v147, 4294901760
    %2949 = vmatpush.msra.mxu0 %v2948
    %v2950 = vand.u32 %v144, 4294901760
    %2951 = vmatpush.msra.mxu0 %v2950
    %v2952 = vand.u32 %v141, 4294901760
    %2953 = vmatpush.msra.mxu0 %v2952
    %v2954 = vand.u32 %v190, 4294901760
    %v2955 = vsub.f32 %v190, %v2954
    %v2956 = vand.u32 %v2955, 4294901760
    %v2957 = vsub.f32 %v2955, %v2956
    %v2958 = vand.u32 %v2957, 4294901760
    %2959 = vmatmul.f32.gmra.mxu0 %v2958
    %v2960 = vpop.f32.mrf.mxu0
    %v2961 = vadd.f32 %v2920, %v2960
    %2962 = vdwg.mxu0
    %v2963 = vand.u32 %v186, 4294901760
    %v2964 = vsub.f32 %v186, %v2963
    %v2965 = vand.u32 %v2964, 4294901760
    %v2966 = vsub.f32 %v2964, %v2965
    %v2967 = vand.u32 %v2966, 4294901760
    %2968 = vmatpush.msra.mxu0 %v2967
    %v2969 = vand.u32 %v183, 4294901760
    %v2970 = vsub.f32 %v183, %v2969
    %v2971 = vand.u32 %v2970, 4294901760
    %v2972 = vsub.f32 %v2970, %v2971
    %v2973 = vand.u32 %v2972, 4294901760
    %2974 = vmatpush.msra.mxu0 %v2973
    %v2975 = vand.u32 %v180, 4294901760
    %v2976 = vsub.f32 %v180, %v2975
    %v2977 = vand.u32 %v2976, 4294901760
    %v2978 = vsub.f32 %v2976, %v2977
    %v2979 = vand.u32 %v2978, 4294901760
    %2980 = vmatpush.msra.mxu0 %v2979
    %v2981 = vand.u32 %v177, 4294901760
    %v2982 = vsub.f32 %v177, %v2981
    %v2983 = vand.u32 %v2982, 4294901760
    %v2984 = vsub.f32 %v2982, %v2983
    %v2985 = vand.u32 %v2984, 4294901760
    %2986 = vmatpush.msra.mxu0 %v2985
    %v2987 = vand.u32 %v174, 4294901760
    %v2988 = vsub.f32 %v174, %v2987
    %v2989 = vand.u32 %v2988, 4294901760
    %v2990 = vsub.f32 %v2988, %v2989
    %v2991 = vand.u32 %v2990, 4294901760
    %2992 = vmatpush.msra.mxu0 %v2991
    %v2993 = vand.u32 %v171, 4294901760
    %v2994 = vsub.f32 %v171, %v2993
    %v2995 = vand.u32 %v2994, 4294901760
    %v2996 = vsub.f32 %v2994, %v2995
    %v2997 = vand.u32 %v2996, 4294901760
    %2998 = vmatpush.msra.mxu0 %v2997
    %v2999 = vand.u32 %v168, 4294901760
    %v3000 = vsub.f32 %v168, %v2999
    %v3001 = vand.u32 %v3000, 4294901760
    %v3002 = vsub.f32 %v3000, %v3001
    %v3003 = vand.u32 %v3002, 4294901760
    %3004 = vmatpush.msra.mxu0 %v3003
    %v3005 = vand.u32 %v165, 4294901760
    %v3006 = vsub.f32 %v165, %v3005
    %v3007 = vand.u32 %v3006, 4294901760
    %v3008 = vsub.f32 %v3006, %v3007
    %v3009 = vand.u32 %v3008, 4294901760
    %3010 = vmatpush.msra.mxu0 %v3009
    %v3011 = vand.u32 %v162, 4294901760
    %v3012 = vsub.f32 %v162, %v3011
    %v3013 = vand.u32 %v3012, 4294901760
    %v3014 = vsub.f32 %v3012, %v3013
    %v3015 = vand.u32 %v3014, 4294901760
    %3016 = vmatpush.msra.mxu0 %v3015
    %v3017 = vand.u32 %v159, 4294901760
    %v3018 = vsub.f32 %v159, %v3017
    %v3019 = vand.u32 %v3018, 4294901760
    %v3020 = vsub.f32 %v3018, %v3019
    %v3021 = vand.u32 %v3020, 4294901760
    %3022 = vmatpush.msra.mxu0 %v3021
    %v3023 = vand.u32 %v156, 4294901760
    %v3024 = vsub.f32 %v156, %v3023
    %v3025 = vand.u32 %v3024, 4294901760
    %v3026 = vsub.f32 %v3024, %v3025
    %v3027 = vand.u32 %v3026, 4294901760
    %3028 = vmatpush.msra.mxu0 %v3027
    %v3029 = vand.u32 %v153, 4294901760
    %v3030 = vsub.f32 %v153, %v3029
    %v3031 = vand.u32 %v3030, 4294901760
    %v3032 = vsub.f32 %v3030, %v3031
    %v3033 = vand.u32 %v3032, 4294901760
    %3034 = vmatpush.msra.mxu0 %v3033
    %v3035 = vand.u32 %v150, 4294901760
    %v3036 = vsub.f32 %v150, %v3035
    %v3037 = vand.u32 %v3036, 4294901760
    %v3038 = vsub.f32 %v3036, %v3037
    %v3039 = vand.u32 %v3038, 4294901760
    %3040 = vmatpush.msra.mxu0 %v3039
    %v3041 = vand.u32 %v147, 4294901760
    %v3042 = vsub.f32 %v147, %v3041
    %v3043 = vand.u32 %v3042, 4294901760
    %v3044 = vsub.f32 %v3042, %v3043
    %v3045 = vand.u32 %v3044, 4294901760
    %3046 = vmatpush.msra.mxu0 %v3045
    %v3047 = vand.u32 %v144, 4294901760
    %v3048 = vsub.f32 %v144, %v3047
    %v3049 = vand.u32 %v3048, 4294901760
    %v3050 = vsub.f32 %v3048, %v3049
    %v3051 = vand.u32 %v3050, 4294901760
    %3052 = vmatpush.msra.mxu0 %v3051
    %v3053 = vand.u32 %v141, 4294901760
    %v3054 = vsub.f32 %v141, %v3053
    %v3055 = vand.u32 %v3054, 4294901760
    %v3056 = vsub.f32 %v3054, %v3055
    %v3057 = vand.u32 %v3056, 4294901760
    %3058 = vmatpush.msra.mxu0 %v3057
    %v3059 = vand.u32 %v190, 4294901760
    %3060 = vmatmul.f32.gmra.mxu0 %v3059
    %v3061 = vpop.f32.mrf.mxu0
    %v3062 = vadd.f32 %v2961, %v3061
    %3063 = vdwg.mxu0
    %v3064 = vand.u32 %v186, 4294901760
    %v3065 = vsub.f32 %v186, %v3064
    %3066 = vmatpush.msra.mxu0 %v3065
    %v3067 = vand.u32 %v183, 4294901760
    %v3068 = vsub.f32 %v183, %v3067
    %3069 = vmatpush.msra.mxu0 %v3068
    %v3070 = vand.u32 %v180, 4294901760
    %v3071 = vsub.f32 %v180, %v3070
    %3072 = vmatpush.msra.mxu0 %v3071
    %v3073 = vand.u32 %v177, 4294901760
    %v3074 = vsub.f32 %v177, %v3073
    %3075 = vmatpush.msra.mxu0 %v3074
    %v3076 = vand.u32 %v174, 4294901760
    %v3077 = vsub.f32 %v174, %v3076
    %3078 = vmatpush.msra.mxu0 %v3077
    %v3079 = vand.u32 %v171, 4294901760
    %v3080 = vsub.f32 %v171, %v3079
    %3081 = vmatpush.msra.mxu0 %v3080
    %v3082 = vand.u32 %v168, 4294901760
    %v3083 = vsub.f32 %v168, %v3082
    %3084 = vmatpush.msra.mxu0 %v3083
    %v3085 = vand.u32 %v165, 4294901760
    %v3086 = vsub.f32 %v165, %v3085
    %3087 = vmatpush.msra.mxu0 %v3086
    %v3088 = vand.u32 %v162, 4294901760
    %v3089 = vsub.f32 %v162, %v3088
    %3090 = vmatpush.msra.mxu0 %v3089
    %v3091 = vand.u32 %v159, 4294901760
    %v3092 = vsub.f32 %v159, %v3091
    %3093 = vmatpush.msra.mxu0 %v3092
    %v3094 = vand.u32 %v156, 4294901760
    %v3095 = vsub.f32 %v156, %v3094
    %3096 = vmatpush.msra.mxu0 %v3095
    %v3097 = vand.u32 %v153, 4294901760
    %v3098 = vsub.f32 %v153, %v3097
    %3099 = vmatpush.msra.mxu0 %v3098
    %v3100 = vand.u32 %v150, 4294901760
    %v3101 = vsub.f32 %v150, %v3100
    %3102 = vmatpush.msra.mxu0 %v3101
    %v3103 = vand.u32 %v147, 4294901760
    %v3104 = vsub.f32 %v147, %v3103
    %3105 = vmatpush.msra.mxu0 %v3104
    %v3106 = vand.u32 %v144, 4294901760
    %v3107 = vsub.f32 %v144, %v3106
    %3108 = vmatpush.msra.mxu0 %v3107
    %v3109 = vand.u32 %v141, 4294901760
    %v3110 = vsub.f32 %v141, %v3109
    %3111 = vmatpush.msra.mxu0 %v3110
    %v3112 = vand.u32 %v190, 4294901760
    %v3113 = vsub.f32 %v190, %v3112
    %3114 = vmatmul.f32.gmra.mxu0 %v3113
    %v3115 = vpop.f32.mrf.mxu0
    %v3116 = vadd.f32 %v3062, %v3115
    %3117 = vdwg.mxu0
    %v3118 = vand.u32 %v186, 4294901760
    %3119 = vmatpush.msra.mxu0 %v3118
    %v3120 = vand.u32 %v183, 4294901760
    %3121 = vmatpush.msra.mxu0 %v3120
    %v3122 = vand.u32 %v180, 4294901760
    %3123 = vmatpush.msra.mxu0 %v3122
    %v3124 = vand.u32 %v177, 4294901760
    %3125 = vmatpush.msra.mxu0 %v3124
    %v3126 = vand.u32 %v174, 4294901760
    %3127 = vmatpush.msra.mxu0 %v3126
    %v3128 = vand.u32 %v171, 4294901760
    %3129 = vmatpush.msra.mxu0 %v3128
    %v3130 = vand.u32 %v168, 4294901760
    %3131 = vmatpush.msra.mxu0 %v3130
    %v3132 = vand.u32 %v165, 4294901760
    %3133 = vmatpush.msra.mxu0 %v3132
    %v3134 = vand.u32 %v162, 4294901760
    %3135 = vmatpush.msra.mxu0 %v3134
    %v3136 = vand.u32 %v159, 4294901760
    %3137 = vmatpush.msra.mxu0 %v3136
    %v3138 = vand.u32 %v156, 4294901760
    %3139 = vmatpush.msra.mxu0 %v3138
    %v3140 = vand.u32 %v153, 4294901760
    %3141 = vmatpush.msra.mxu0 %v3140
    %v3142 = vand.u32 %v150, 4294901760
    %3143 = vmatpush.msra.mxu0 %v3142
    %v3144 = vand.u32 %v147, 4294901760
    %3145 = vmatpush.msra.mxu0 %v3144
    %v3146 = vand.u32 %v144, 4294901760
    %3147 = vmatpush.msra.mxu0 %v3146
    %v3148 = vand.u32 %v141, 4294901760
    %3149 = vmatpush.msra.mxu0 %v3148
    %v3150 = vand.u32 %v190, 4294901760
    %v3151 = vsub.f32 %v190, %v3150
    %v3152 = vand.u32 %v3151, 4294901760
    %3153 = vmatmul.f32.gmra.mxu0 %v3152
    %v3154 = vpop.f32.mrf.mxu0
    %v3155 = vadd.f32 %v3116, %v3154
    %3156 = vdwg.mxu0
    %v3157 = vand.u32 %v186, 4294901760
    %v3158 = vsub.f32 %v186, %v3157
    %v3159 = vand.u32 %v3158, 4294901760
    %3160 = vmatpush.msra.mxu0 %v3159
    %v3161 = vand.u32 %v183, 4294901760
    %v3162 = vsub.f32 %v183, %v3161
    %v3163 = vand.u32 %v3162, 4294901760
    %3164 = vmatpush.msra.mxu0 %v3163
    %v3165 = vand.u32 %v180, 4294901760
    %v3166 = vsub.f32 %v180, %v3165
    %v3167 = vand.u32 %v3166, 4294901760
    %3168 = vmatpush.msra.mxu0 %v3167
    %v3169 = vand.u32 %v177, 4294901760
    %v3170 = vsub.f32 %v177, %v3169
    %v3171 = vand.u32 %v3170, 4294901760
    %3172 = vmatpush.msra.mxu0 %v3171
    %v3173 = vand.u32 %v174, 4294901760
    %v3174 = vsub.f32 %v174, %v3173
    %v3175 = vand.u32 %v3174, 4294901760
    %3176 = vmatpush.msra.mxu0 %v3175
    %v3177 = vand.u32 %v171, 4294901760
    %v3178 = vsub.f32 %v171, %v3177
    %v3179 = vand.u32 %v3178, 4294901760
    %3180 = vmatpush.msra.mxu0 %v3179
    %v3181 = vand.u32 %v168, 4294901760
    %v3182 = vsub.f32 %v168, %v3181
    %v3183 = vand.u32 %v3182, 4294901760
    %3184 = vmatpush.msra.mxu0 %v3183
    %v3185 = vand.u32 %v165, 4294901760
    %v3186 = vsub.f32 %v165, %v3185
    %v3187 = vand.u32 %v3186, 4294901760
    %3188 = vmatpush.msra.mxu0 %v3187
    %v3189 = vand.u32 %v162, 4294901760
    %v3190 = vsub.f32 %v162, %v3189
    %v3191 = vand.u32 %v3190, 4294901760
    %3192 = vmatpush.msra.mxu0 %v3191
    %v3193 = vand.u32 %v159, 4294901760
    %v3194 = vsub.f32 %v159, %v3193
    %v3195 = vand.u32 %v3194, 4294901760
    %3196 = vmatpush.msra.mxu0 %v3195
    %v3197 = vand.u32 %v156, 4294901760
    %v3198 = vsub.f32 %v156, %v3197
    %v3199 = vand.u32 %v3198, 4294901760
    %3200 = vmatpush.msra.mxu0 %v3199
    %v3201 = vand.u32 %v153, 4294901760
    %v3202 = vsub.f32 %v153, %v3201
    %v3203 = vand.u32 %v3202, 4294901760
    %3204 = vmatpush.msra.mxu0 %v3203
    %v3205 = vand.u32 %v150, 4294901760
    %v3206 = vsub.f32 %v150, %v3205
    %v3207 = vand.u32 %v3206, 4294901760
    %3208 = vmatpush.msra.mxu0 %v3207
    %v3209 = vand.u32 %v147, 4294901760
    %v3210 = vsub.f32 %v147, %v3209
    %v3211 = vand.u32 %v3210, 4294901760
    %3212 = vmatpush.msra.mxu0 %v3211
    %v3213 = vand.u32 %v144, 4294901760
    %v3214 = vsub.f32 %v144, %v3213
    %v3215 = vand.u32 %v3214, 4294901760
    %3216 = vmatpush.msra.mxu0 %v3215
    %v3217 = vand.u32 %v141, 4294901760
    %v3218 = vsub.f32 %v141, %v3217
    %v3219 = vand.u32 %v3218, 4294901760
    %3220 = vmatpush.msra.mxu0 %v3219
    %v3221 = vand.u32 %v190, 4294901760
    %3222 = vmatmul.f32.gmra.mxu0 %v3221
    %v3223 = vpop.f32.mrf.mxu0
    %v3224 = vadd.f32 %v3155, %v3223
    %3225 = vdwg.mxu0
    %v3226 = vand.u32 %v186, 4294901760
    %3227 = vmatpush.msra.mxu0 %v3226
    %v3228 = vand.u32 %v183, 4294901760
    %3229 = vmatpush.msra.mxu0 %v3228
    %v3230 = vand.u32 %v180, 4294901760
    %3231 = vmatpush.msra.mxu0 %v3230
    %v3232 = vand.u32 %v177, 4294901760
    %3233 = vmatpush.msra.mxu0 %v3232
    %v3234 = vand.u32 %v174, 4294901760
    %3235 = vmatpush.msra.mxu0 %v3234
    %v3236 = vand.u32 %v171, 4294901760
    %3237 = vmatpush.msra.mxu0 %v3236
    %v3238 = vand.u32 %v168, 4294901760
    %3239 = vmatpush.msra.mxu0 %v3238
    %v3240 = vand.u32 %v165, 4294901760
    %3241 = vmatpush.msra.mxu0 %v3240
    %v3242 = vand.u32 %v162, 4294901760
    %3243 = vmatpush.msra.mxu0 %v3242
    %v3244 = vand.u32 %v159, 4294901760
    %3245 = vmatpush.msra.mxu0 %v3244
    %v3246 = vand.u32 %v156, 4294901760
    %3247 = vmatpush.msra.mxu0 %v3246
    %v3248 = vand.u32 %v153, 4294901760
    %3249 = vmatpush.msra.mxu0 %v3248
    %v3250 = vand.u32 %v150, 4294901760
    %3251 = vmatpush.msra.mxu0 %v3250
    %v3252 = vand.u32 %v147, 4294901760
    %3253 = vmatpush.msra.mxu0 %v3252
    %v3254 = vand.u32 %v144, 4294901760
    %3255 = vmatpush.msra.mxu0 %v3254
    %v3256 = vand.u32 %v141, 4294901760
    %3257 = vmatpush.msra.mxu0 %v3256
    %v3258 = vand.u32 %v190, 4294901760
    %3259 = vmatmul.f32.gmra.mxu0 %v3258
    %v3260 = vpop.f32.mrf.mxu0
    %v3261 = vadd.f32 %v3224, %v3260
    %3262 = vdwg.mxu0
    %v3266 = vrot.slane %v2238, 7
    %v3267 = vrot.slane %v3261, 6
    %vm3268 = vcmask 1040384
    %v3269 = vsel %vm3268, %v1215, %v3266
    %vm3270 = vcmask 1041408
    %v3271 = vsel %vm3270, %v3269, %v3267
    %v3273 = vsub.f32 %v42, %v3271
    %v3274 = vlaneseq
    %vm3275 = vcmp.ge.s32.totalorder %v3274, 0
    %vm3276 = vcmp.lt.s32.totalorder %v3274, 384
    %vm3277 = vmand %vm3275, %vm3276
    %3278 = vst.msk [vmem:[#allocation7] sm:$0x7] %vm3277, %v3273
    // Predicated region
    $region18: #{tpu_custom_call.1} parent=1 // pred_check
      _
    $region19: #{tpu_custom_call.1} parent=1 // pred_check_branch
      %3280 = sbr.rel (0) target = $region21
    $region20: #{tpu_custom_call.1} parent=1 // pred_region
      %3282 = vsyncadd [#allocation4], 0
      %s3284 = sshll.u32 [#allocation7], 4
      %s3285 = int_to_ptr.vmem [resolvable:$true] %s3284
      %s3286 = sshll.u32 %s2, 4
      %s3287 = int_to_ptr.hbm [resolvable:$true] %s3286
      %3289 = dma.vmem_to_hbm [thread:$0]  %s3285, 48, %s3287, [#allocation4]
    $region21: #{tpu_custom_call.1} parent=1 // pred_fallthru
      _
    // Predicated region
    $region22: #{tpu_custom_call.1} parent=1 // pred_check
      _
    $region23: #{tpu_custom_call.1} parent=1 // pred_check_branch
      %3291 = sbr.rel (0) target = $region25
    $region24: #{tpu_custom_call.1} parent=1 // pred_region
      %3293 = dma.done [#allocation4], 48
    $region25: #{tpu_custom_call.1} parent=1 // pred_fallthru
      _
    %3294 = vsyncpa [#allocation3], 1
    %3295 = vsyncpa [#allocation6], 1
    %3296 = vsyncpa [#allocation4], 1

</llo_original>
